<compile_context>
chip_gen: v6e
topology: v6e:2x2x1
jax: 0.10.0
libtpu: 0.0.40
codegen_flags: <defaults>
</compile_context>

<pallas_src>
import functools
import math

import jax
import jax.numpy as jnp
from jax import lax
from jax.experimental import pallas as pl
from jax.experimental.pallas import tpu as pltpu


def _round_up(x, m):
    return ((x + m - 1) // m) * m


def _num_tensorcores():
    """Best-effort per-chip TensorCore count (v7x has 2); safe fallback = 1."""
    try:
        n = int(getattr(jax.devices()[0], "num_cores", 1))
        return max(1, n)
    except Exception:
        return 1


def _grud_recurrence_kernel(pz_ref, pr_ref, ph_ref, dh_ref, wzr_ref, whh_ref,
                            out_ref, h_scr, *, hidden_p, block_t, unroll,
                            last_only):
    """Sequential GRU-D recurrence over one (batch-chunk, time-chunk) tile.

    pz/pr/ph_ref : (Tc, Bc, Hp)  precomputed gate pre-activations (z, r, h~)
    dh_ref       : (Tc, Bc, Hp)  precomputed hidden-state decay
    wzr_ref      : (Hp, 2Hp)     [W_zh | W_rh]
    whh_ref      : (Hp, Hp)      W_hh (applied to r*h)
    out_ref      : (Tc, Bc, Hp)  or (Bc, Hp) when last_only
    h_scr        : (Bc, Hp)      hidden state, carried across time chunks
    """
    Hp = hidden_p

    @pl.when(pl.program_id(1) == 0)
    def _():
        h_scr[...] = jnp.zeros_like(h_scr)

    def step(t, h):
        # ref[t] is a dense, lane-aligned (Bc, Hp) slab (Hp % 128 == 0).
        h = dh_ref[t].astype(jnp.float32) * h
        # Read weights from their VMEM window inside the loop body; do not pin
        # them as live vreg values across the (unrolled) loop.
        zr = jnp.dot(h, wzr_ref[...], preferred_element_type=jnp.float32)
        z = jax.nn.sigmoid(pz_ref[t].astype(jnp.float32) + zr[:, :Hp])
        r = jax.nn.sigmoid(pr_ref[t].astype(jnp.float32) + zr[:, Hp:])
        h_tilde = jnp.tanh(
            ph_ref[t].astype(jnp.float32)
            + jnp.dot(r * h, whh_ref[...], preferred_element_type=jnp.float32))
        h = (1.0 - z) * h + z * h_tilde
        if not last_only:
            out_ref[t] = h.astype(out_ref.dtype)
        return h

    h = lax.fori_loop(0, block_t, step, h_scr[...], unroll=unroll)
    h_scr[...] = h

    if last_only:
        @pl.when(pl.program_id(1) == pl.num_programs(1) - 1)
        def _():
            out_ref[...] = h.astype(out_ref.dtype)


def _pack_params(params, hidden_pad):
    """Fuse per-gate weights; pad recurrent weights to the lane-aligned Hp."""
    # Non-recurrent projection: [x_hat | mask] @ (2D, 3H) + (1, 3H)
    w_in = jnp.concatenate([
        jnp.concatenate([params["wzx"], params["wzm"]], axis=0),
        jnp.concatenate([params["wrx"], params["wrm"]], axis=0),
        jnp.concatenate([params["whx"], params["whm"]], axis=0),
    ], axis=1)
    b_in = jnp.concatenate([params["bz"], params["br"], params["bh"]], axis=1)

    Hp = hidden_pad

    def pad2(w):
        return jnp.pad(w, ((0, Hp - w.shape[0]), (0, Hp - w.shape[1])))

    # Zero-padding rows/cols keeps the padded hidden lanes exactly zero.
    w_zr = jnp.concatenate([pad2(params["wzh"]), pad2(params["wrh"])], axis=1)
    w_hh = pad2(params["whh"])
    return w_in, b_in, w_zr, w_hh


def grud_forward(inp, params, hidden_size, output_last=False,
                 block_t=None, block_b=None, stream_dtype=jnp.float32,
                 vmem_limit_bytes=48 * 1024 * 1024):
    """inp: (B, 4, T, D) with channels [X, X_last_obsv, Mask, Delta]."""
    B, C, T, D = inp.shape
    assert C == 4
    H = hidden_size
    Hp = _round_up(H, 128)   # lane-aligned hidden width
    Bp = _round_up(B, 8)     # sublane-aligned batch (MXU M dimension)

    X = inp[:, 0]
    X_last = inp[:, 1]
    Mask = inp[:, 2]
    Delta = inp[:, 3]

    # ---- hoisted (non-recurrent) compute: one batched GEMM over B*T rows ----
    # gamma_x_l is FilterLinear with identity filter -> diagonal linear map.
    delta_x = jnp.exp(-jnp.maximum(
        0.0, Delta * params["gx_diag"] + params["gx_bias"]))                  # (B,T,D)
    delta_h = jnp.exp(-jnp.maximum(
        0.0, jnp.einsum("btd,dh->bth", Delta, params["wgh"]) + params["bgh"]))  # (B,T,H)
    x_hat = Mask * X + (1.0 - Mask) * (delta_x * X_last)                      # (B,T,D)

    w_in, b_in, w_zr, w_hh = _pack_params(params, Hp)
    xm = jnp.concatenate([x_hat, Mask], axis=-1)                              # (B,T,2D)
    pre = jnp.einsum("bti,io->bto", xm, w_in) + b_in                          # (B,T,3H)
    pre_z, pre_r, pre_h = pre[..., :H], pre[..., H:2 * H], pre[..., 2 * H:]

    def to_kernel_layout(x):
        # (B, T, W) -> (T, Bp, Hp): time leading (no tile constraint),
        # batch on sublanes, lane-dense hidden.
        x = jnp.transpose(x, (1, 0, 2))
        x = jnp.pad(x, ((0, 0), (0, Bp - B), (0, Hp - x.shape[-1])))
        return x.astype(stream_dtype)

    pre_z = to_kernel_layout(pre_z)
    pre_r = to_kernel_layout(pre_r)
    pre_h = to_kernel_layout(pre_h)
    dh = to_kernel_layout(delta_h)

    w_zr = w_zr.astype(jnp.float32)
    w_hh = w_hh.astype(jnp.float32)

    # ---- block sizing ----
    if block_b is None:
        block_b = Bp
        ntc = _num_tensorcores()
        # Multi-TC chips (v7x): split the parallel batch axis evenly per core,
        # but never below 8 sublanes.
        if ntc > 1 and Bp % (8 * ntc) == 0:
            block_b = Bp // ntc
    assert Bp % block_b == 0 and block_b % 8 == 0
    nb = Bp // block_b

    itemsize = jnp.dtype(stream_dtype).itemsize
    weight_bytes = 2 * (Hp * 2 * Hp + Hp * Hp) * 4        # double-buffered weights
    scratch_bytes = block_b * Hp * 4
    budget = int(0.75 * vmem_limit_bytes) - weight_bytes - scratch_bytes

    if block_t is None:
        divisors = [t for t in range(1, T + 1) if T % t == 0]
        block_t = divisors[0]
        for t in divisors:
            # 4 input streams (stream_dtype) + 1 f32 output stream, x2 buffers.
            slab = 2 * block_b * t * Hp * (4 * itemsize + 4)
            if slab <= budget:
                block_t = t
    assert T % block_t == 0
    nt = T // block_t
    unroll = max(1, min(block_t, 8 if Hp <= 128 else 4))

    def seq_spec():
        return pl.BlockSpec((block_t, block_b, Hp), lambda b, c: (c, b, 0))

    def wgt_spec(shape):
        return pl.BlockSpec(shape, lambda b, c: (0, 0))

    if output_last:
        out_shape = jax.ShapeDtypeStruct((Bp, Hp), jnp.float32)
        out_spec = pl.BlockSpec((block_b, Hp), lambda b, c: (b, 0))
    else:
        out_shape = jax.ShapeDtypeStruct((T, Bp, Hp), jnp.float32)
        out_spec = pl.BlockSpec((block_t, block_b, Hp), lambda b, c: (c, b, 0))

    kernel = functools.partial(_grud_recurrence_kernel, hidden_p=Hp,
                               block_t=block_t, unroll=unroll,
                               last_only=output_last)

    out = pl.pallas_call(
        kernel,
        out_shape=out_shape,
        grid_spec=pltpu.PrefetchScalarGridSpec(
            num_scalar_prefetch=0,
            grid=(nb, nt),
            in_specs=[
                seq_spec(),              # pre_z
                seq_spec(),              # pre_r
                seq_spec(),              # pre_h
                seq_spec(),              # delta_h
                wgt_spec((Hp, 2 * Hp)),  # [W_zh | W_rh]
                wgt_spec((Hp, Hp)),      # W_hh
            ],
            out_specs=out_spec,
            scratch_shapes=[pltpu.VMEM((block_b, Hp), jnp.float32)],
        ),
        compiler_params=pltpu.CompilerParams(
            # Batch chunks are independent (megacore-parallel); the time axis
            # carries the hidden state and must stay sequential ("arbitrary").
            dimension_semantics=("parallel", "arbitrary"),
            vmem_limit_bytes=vmem_limit_bytes,
        ),
    )(pre_z, pre_r, pre_h, dh, w_zr, w_hh)

    if output_last:
        return out[:B, :H]
    return jnp.transpose(out[:, :B, :H], (1, 0, 2))   # (B, T, H)


def init_params(key, input_size, hidden_size):
    """Deterministic init mimicking the PyTorch module's parameter shapes."""
    D, H = input_size, hidden_size
    combined_in = 2 * D + H
    ks = jax.random.split(key, 12)
    stdv_lin = 1.0 / math.sqrt(combined_in)
    stdv_gx = 1.0 / math.sqrt(D)

    def u(k, shape, s):
        return jax.random.uniform(k, shape, jnp.float32, -s, s)

    Wz = u(ks[0], (H, combined_in), stdv_lin)
    bz = u(ks[1], (1, H), stdv_lin)
    Wr = u(ks[2], (H, combined_in), stdv_lin)
    br = u(ks[3], (1, H), stdv_lin)
    Wh = u(ks[4], (H, combined_in), stdv_lin)
    bh = u(ks[5], (1, H), stdv_lin)

    def split_t(W):
        return (W[:, :D].T, W[:, D:D + H].T, W[:, D + H:].T)

    wzx, wzh, wzm = split_t(Wz)
    wrx, wrh, wrm = split_t(Wr)
    whx, whh, whm = split_t(Wh)

    # gamma_x_l: FilterLinear with identity filter -> only the diagonal matters.
    Wgx = u(ks[6], (D, D), stdv_gx)
    gx_diag = jnp.diagonal(Wgx).reshape(1, D)
    gx_bias = u(ks[7], (1, D), stdv_gx)

    Wgh = u(ks[8], (H, D), stdv_gx)   # nn.Linear(D, H)
    bgh = u(ks[9], (1, H), stdv_gx)

    return {
        "gx_diag": gx_diag, "gx_bias": gx_bias,
        "wgh": Wgh.T, "bgh": bgh,
        "wzx": wzx, "wzh": wzh, "wzm": wzm, "bz": bz,
        "wrx": wrx, "wrh": wrh, "wrm": wrm, "br": br,
        "whx": whx, "whh": whh, "whm": whm, "bh": bh,
    }


def grud_reference(inp, params, hidden_size):
    """Pure-JAX reference of the same forward pass (for a correctness check)."""
    B, _, T, D = inp.shape
    H = hidden_size
    X, X_last, Mask, Delta = inp[:, 0], inp[:, 1], inp[:, 2], inp[:, 3]
    h = jnp.zeros((B, H), jnp.float32)
    outs = []
    for i in range(T):
        x, xl, m, d = X[:, i], X_last[:, i], Mask[:, i], Delta[:, i]
        delta_x = jnp.exp(-jnp.maximum(0.0, d * params["gx_diag"] + params["gx_bias"]))
        delta_h = jnp.exp(-jnp.maximum(0.0, d @ params["wgh"] + params["bgh"]))
        x_hat = m * x + (1 - m) * (delta_x * xl)
        h = delta_h * h
        z = jax.nn.sigmoid(x_hat @ params["wzx"] + h @ params["wzh"] + m @ params["wzm"] + params["bz"])
        r = jax.nn.sigmoid(x_hat @ params["wrx"] + h @ params["wrh"] + m @ params["wrm"] + params["br"])
        h_tilde = jnp.tanh(x_hat @ params["whx"] + (r * h) @ params["whh"] + m @ params["whm"] + params["bh"])
        h = (1 - z) * h + z * h_tilde
        outs.append(h)
    return jnp.stack(outs, axis=1)


if __name__ == "__main__":
    B, T, D, H = 2, 8, 4, 32

    key = jax.random.PRNGKey(0)
    k_in, k_mask, k_delta, k_param = jax.random.split(key, 4)

    X = jax.random.normal(k_in, (B, T, D), jnp.float32)
    X_last = jnp.roll(X, 1, axis=1)
    Mask = (jax.random.uniform(k_mask, (B, T, D)) > 0.3).astype(jnp.float32)
    Delta = jax.random.uniform(k_delta, (B, T, D), jnp.float32)
    inp = jnp.stack([X, X_last, Mask, Delta], axis=1)  # (B, 4, T, D)

    params = init_params(k_param, D, H)

    out = grud_forward(inp, params, hidden_size=H, output_last=False)
    out = jax.block_until_ready(out)

    ref = grud_reference(inp, params, hidden_size=H)
    assert out.shape == (B, T, H)
    assert jnp.allclose(out, ref, atol=2e-5, rtol=2e-5), "Pallas output mismatch vs reference"

    out_last = grud_forward(inp, params, hidden_size=H, output_last=True)
    out_last = jax.block_until_ready(out_last)
    assert out_last.shape == (B, H)
    assert jnp.allclose(out_last, ref[:, -1, :], atol=2e-5, rtol=2e-5), \
        "Pallas output_last mismatch vs reference"

    print("KERNEL_OK")
</pallas_src>

<mosaic_0001>
module attributes {stable_mosaic.version = 11 : i64} {
  func.func @_grud_recurrence_kernel(%arg0: i32, %arg1: i32, %arg2: memref<8x8x128xf32, #tpu.memory_space<vmem>>, %arg3: memref<8x8x128xf32, #tpu.memory_space<vmem>>, %arg4: memref<8x8x128xf32, #tpu.memory_space<vmem>>, %arg5: memref<8x8x128xf32, #tpu.memory_space<vmem>>, %arg6: memref<128x256xf32, #tpu.memory_space<vmem>>, %arg7: memref<128x128xf32, #tpu.memory_space<vmem>>, %arg8: memref<8x8x128xf32, #tpu.memory_space<vmem>>, %arg9: memref<8x128xf32, #tpu.memory_space<vmem>>) attributes {dimension_semantics = [#tpu.dimension_semantics<parallel>, #tpu.dimension_semantics<arbitrary>], iteration_bounds = array<i64: 1, 1>, scalar_prefetch = 0 : i64, scratch_operands = 1 : i64, tpu.core_type = #tpu.core_type<tc>, window_params = [{transform_indices = @transform_0, window_bounds = array<i64: 8, 8, 128>}, {transform_indices = @transform_1, window_bounds = array<i64: 8, 8, 128>}, {transform_indices = @transform_2, window_bounds = array<i64: 8, 8, 128>}, {transform_indices = @transform_3, window_bounds = array<i64: 8, 8, 128>}, {pipeline_mode = #tpu.pipeline_mode<synchronous>, transform_indices = @transform_4, window_bounds = array<i64: 128, 256>}, {pipeline_mode = #tpu.pipeline_mode<synchronous>, transform_indices = @transform_5, window_bounds = array<i64: 128, 128>}, {transform_indices = @transform_6, window_bounds = array<i64: 8, 8, 128>}]} {
    %c0_i32 = arith.constant 0 : i32
    %0 = arith.cmpi eq, %arg1, %c0_i32 : i32
    %1 = arith.extui %0 : i1 to i32
    %c0_i32_0 = arith.constant 0 : i32
    %2 = arith.cmpi ne, %1, %c0_i32_0 : i32
    scf.if %2 {
      %cst_156 = arith.constant 0.000000e+00 : f32
      %349 = vector.broadcast %cst_156 : f32 to vector<8x128xf32>
      %c0_157 = arith.constant 0 : index
      %c0_158 = arith.constant 0 : index
      %350 = vector.load %arg9[%c0_157, %c0_158] : memref<8x128xf32, #tpu.memory_space<vmem>>, vector<8x128xf32>
      tpu.vector_store %arg9[%c0_157, %c0_158], %349 {strides = array<i32>} : memref<8x128xf32, #tpu.memory_space<vmem>>, vector<8x128xf32>,
    } else {
    }
    %c0 = arith.constant 0 : index
    %c0_1 = arith.constant 0 : index
    %3 = vector.load %arg9[%c0, %c0_1] : memref<8x128xf32, #tpu.memory_space<vmem>>, vector<8x128xf32>
    %c0_i32_2 = arith.constant 0 : i32
    %4 = arith.index_cast %c0_i32_2 : i32 to index
    %c0_3 = arith.constant 0 : index
    %c0_4 = arith.constant 0 : index
    %5 = vector.load %arg5[%4, %c0_3, %c0_4] : memref<8x8x128xf32, #tpu.memory_space<vmem>>, vector<1x8x128xf32>
    %6 = vector.shape_cast %5 : vector<1x8x128xf32> to vector<8x128xf32>
    %7 = arith.mulf %6, %3 : vector<8x128xf32>
    %c0_5 = arith.constant 0 : index
    %c0_6 = arith.constant 0 : index
    %8 = vector.load %arg6[%c0_5, %c0_6] : memref<128x256xf32, #tpu.memory_space<vmem>>, vector<128x256xf32>
    %cst = arith.constant dense<0.000000e+00> : vector<8x256xf32>
    %9 = tpu.matmul %7, %8, %cst {dimension_numbers = #tpu.dot_dimension_numbers<[1], [0], [0], [1], [0, 0, 1, 1], [], []>} : vector<8x128xf32>, vector<128x256xf32>, vector<8x256xf32> -> vector<8x256xf32>
    %10 = arith.index_cast %c0_i32_2 : i32 to index
    %c0_7 = arith.constant 0 : index
    %c0_8 = arith.constant 0 : index
    %11 = vector.load %arg2[%10, %c0_7, %c0_8] : memref<8x8x128xf32, #tpu.memory_space<vmem>>, vector<1x8x128xf32>
    %12 = vector.shape_cast %11 : vector<1x8x128xf32> to vector<8x128xf32>
    %13 = vector.extract_strided_slice %9 {offsets = [0, 0], sizes = [8, 128], strides = [1, 1]} : vector<8x256xf32> to vector<8x128xf32>
    %14 = arith.addf %12, %13 : vector<8x128xf32>
    %15 = arith.negf %14 : vector<8x128xf32>
    %16 = math.exp %15 : vector<8x128xf32>
    %cst_9 = arith.constant 1.000000e+00 : f32
    %17 = vector.broadcast %cst_9 : f32 to vector<8x128xf32>
    %18 = arith.addf %17, %16 : vector<8x128xf32>
    %19 = arith.divf %17, %18 : vector<8x128xf32>
    %20 = arith.index_cast %c0_i32_2 : i32 to index
    %c0_10 = arith.constant 0 : index
    %c0_11 = arith.constant 0 : index
    %21 = vector.load %arg3[%20, %c0_10, %c0_11] : memref<8x8x128xf32, #tpu.memory_space<vmem>>, vector<1x8x128xf32>
    %22 = vector.shape_cast %21 : vector<1x8x128xf32> to vector<8x128xf32>
    %23 = vector.extract_strided_slice %9 {offsets = [0, 128], sizes = [8, 128], strides = [1, 1]} : vector<8x256xf32> to vector<8x128xf32>
    %24 = arith.addf %22, %23 : vector<8x128xf32>
    %25 = arith.negf %24 : vector<8x128xf32>
    %26 = math.exp %25 : vector<8x128xf32>
    %cst_12 = arith.constant 1.000000e+00 : f32
    %27 = vector.broadcast %cst_12 : f32 to vector<8x128xf32>
    %28 = arith.addf %27, %26 : vector<8x128xf32>
    %29 = arith.divf %27, %28 : vector<8x128xf32>
    %30 = arith.index_cast %c0_i32_2 : i32 to index
    %c0_13 = arith.constant 0 : index
    %c0_14 = arith.constant 0 : index
    %31 = vector.load %arg4[%30, %c0_13, %c0_14] : memref<8x8x128xf32, #tpu.memory_space<vmem>>, vector<1x8x128xf32>
    %32 = vector.shape_cast %31 : vector<1x8x128xf32> to vector<8x128xf32>
    %33 = arith.mulf %29, %7 : vector<8x128xf32>
    %c0_15 = arith.constant 0 : index
    %c0_16 = arith.constant 0 : index
    %34 = vector.load %arg7[%c0_15, %c0_16] : memref<128x128xf32, #tpu.memory_space<vmem>>, vector<128x128xf32>
    %cst_17 = arith.constant dense<0.000000e+00> : vector<8x128xf32>
    %35 = tpu.matmul %33, %34, %cst_17 {dimension_numbers = #tpu.dot_dimension_numbers<[1], [0], [0], [1], [0, 0, 1, 1], [], []>} : vector<8x128xf32>, vector<128x128xf32>, vector<8x128xf32> -> vector<8x128xf32>
    %36 = arith.addf %32, %35 : vector<8x128xf32>
    %37 = math.tanh %36 : vector<8x128xf32>
    %cst_18 = arith.constant 1.000000e+00 : f32
    %38 = vector.broadcast %cst_18 : f32 to vector<8x128xf32>
    %39 = arith.subf %38, %19 : vector<8x128xf32>
    %40 = arith.mulf %39, %7 : vector<8x128xf32>
    %41 = arith.mulf %19, %37 : vector<8x128xf32>
    %42 = arith.addf %40, %41 : vector<8x128xf32>
    %43 = arith.index_cast %c0_i32_2 : i32 to index
    %c0_19 = arith.constant 0 : index
    %c0_20 = arith.constant 0 : index
    %44 = vector.load %arg8[%43, %c0_19, %c0_20] : memref<8x8x128xf32, #tpu.memory_space<vmem>>, vector<1x8x128xf32>
    %45 = vector.shape_cast %44 : vector<1x8x128xf32> to vector<8x128xf32>
    %46 = vector.shape_cast %42 : vector<8x128xf32> to vector<1x8x128xf32>
    tpu.vector_store %arg8[%43, %c0_19, %c0_20], %46 {strides = array<i32>} : memref<8x8x128xf32, #tpu.memory_space<vmem>>, vector<1x8x128xf32>,
    %c1_i32 = arith.constant 1 : i32
    %47 = arith.index_cast %c1_i32 : i32 to index
    %c0_21 = arith.constant 0 : index
    %c0_22 = arith.constant 0 : index
    %48 = vector.load %arg5[%47, %c0_21, %c0_22] : memref<8x8x128xf32, #tpu.memory_space<vmem>>, vector<1x8x128xf32>
    %49 = vector.shape_cast %48 : vector<1x8x128xf32> to vector<8x128xf32>
    %50 = arith.mulf %49, %42 : vector<8x128xf32>
    %c0_23 = arith.constant 0 : index
    %c0_24 = arith.constant 0 : index
    %51 = vector.load %arg6[%c0_23, %c0_24] : memref<128x256xf32, #tpu.memory_space<vmem>>, vector<128x256xf32>
    %cst_25 = arith.constant dense<0.000000e+00> : vector<8x256xf32>
    %52 = tpu.matmul %50, %51, %cst_25 {dimension_numbers = #tpu.dot_dimension_numbers<[1], [0], [0], [1], [0, 0, 1, 1], [], []>} : vector<8x128xf32>, vector<128x256xf32>, vector<8x256xf32> -> vector<8x256xf32>
    %53 = arith.index_cast %c1_i32 : i32 to index
    %c0_26 = arith.constant 0 : index
    %c0_27 = arith.constant 0 : index
    %54 = vector.load %arg2[%53, %c0_26, %c0_27] : memref<8x8x128xf32, #tpu.memory_space<vmem>>, vector<1x8x128xf32>
    %55 = vector.shape_cast %54 : vector<1x8x128xf32> to vector<8x128xf32>
    %56 = vector.extract_strided_slice %52 {offsets = [0, 0], sizes = [8, 128], strides = [1, 1]} : vector<8x256xf32> to vector<8x128xf32>
    %57 = arith.addf %55, %56 : vector<8x128xf32>
    %58 = arith.negf %57 : vector<8x128xf32>
    %59 = math.exp %58 : vector<8x128xf32>
    %cst_28 = arith.constant 1.000000e+00 : f32
    %60 = vector.broadcast %cst_28 : f32 to vector<8x128xf32>
    %61 = arith.addf %60, %59 : vector<8x128xf32>
    %62 = arith.divf %60, %61 : vector<8x128xf32>
    %63 = arith.index_cast %c1_i32 : i32 to index
    %c0_29 = arith.constant 0 : index
    %c0_30 = arith.constant 0 : index
    %64 = vector.load %arg3[%63, %c0_29, %c0_30] : memref<8x8x128xf32, #tpu.memory_space<vmem>>, vector<1x8x128xf32>
    %65 = vector.shape_cast %64 : vector<1x8x128xf32> to vector<8x128xf32>
    %66 = vector.extract_strided_slice %52 {offsets = [0, 128], sizes = [8, 128], strides = [1, 1]} : vector<8x256xf32> to vector<8x128xf32>
    %67 = arith.addf %65, %66 : vector<8x128xf32>
    %68 = arith.negf %67 : vector<8x128xf32>
    %69 = math.exp %68 : vector<8x128xf32>
    %cst_31 = arith.constant 1.000000e+00 : f32
    %70 = vector.broadcast %cst_31 : f32 to vector<8x128xf32>
    %71 = arith.addf %70, %69 : vector<8x128xf32>
    %72 = arith.divf %70, %71 : vector<8x128xf32>
    %73 = arith.index_cast %c1_i32 : i32 to index
    %c0_32 = arith.constant 0 : index
    %c0_33 = arith.constant 0 : index
    %74 = vector.load %arg4[%73, %c0_32, %c0_33] : memref<8x8x128xf32, #tpu.memory_space<vmem>>, vector<1x8x128xf32>
    %75 = vector.shape_cast %74 : vector<1x8x128xf32> to vector<8x128xf32>
    %76 = arith.mulf %72, %50 : vector<8x128xf32>
    %c0_34 = arith.constant 0 : index
    %c0_35 = arith.constant 0 : index
    %77 = vector.load %arg7[%c0_34, %c0_35] : memref<128x128xf32, #tpu.memory_space<vmem>>, vector<128x128xf32>
    %cst_36 = arith.constant dense<0.000000e+00> : vector<8x128xf32>
    %78 = tpu.matmul %76, %77, %cst_36 {dimension_numbers = #tpu.dot_dimension_numbers<[1], [0], [0], [1], [0, 0, 1, 1], [], []>} : vector<8x128xf32>, vector<128x128xf32>, vector<8x128xf32> -> vector<8x128xf32>
    %79 = arith.addf %75, %78 : vector<8x128xf32>
    %80 = math.tanh %79 : vector<8x128xf32>
    %cst_37 = arith.constant 1.000000e+00 : f32
    %81 = vector.broadcast %cst_37 : f32 to vector<8x128xf32>
    %82 = arith.subf %81, %62 : vector<8x128xf32>
    %83 = arith.mulf %82, %50 : vector<8x128xf32>
    %84 = arith.mulf %62, %80 : vector<8x128xf32>
    %85 = arith.addf %83, %84 : vector<8x128xf32>
    %86 = arith.index_cast %c1_i32 : i32 to index
    %c0_38 = arith.constant 0 : index
    %c0_39 = arith.constant 0 : index
    %87 = vector.load %arg8[%86, %c0_38, %c0_39] : memref<8x8x128xf32, #tpu.memory_space<vmem>>, vector<1x8x128xf32>
    %88 = vector.shape_cast %87 : vector<1x8x128xf32> to vector<8x128xf32>
    %89 = vector.shape_cast %85 : vector<8x128xf32> to vector<1x8x128xf32>
    tpu.vector_store %arg8[%86, %c0_38, %c0_39], %89 {strides = array<i32>} : memref<8x8x128xf32, #tpu.memory_space<vmem>>, vector<1x8x128xf32>,
    %c2_i32 = arith.constant 2 : i32
    %90 = arith.index_cast %c2_i32 : i32 to index
    %c0_40 = arith.constant 0 : index
    %c0_41 = arith.constant 0 : index
    %91 = vector.load %arg5[%90, %c0_40, %c0_41] : memref<8x8x128xf32, #tpu.memory_space<vmem>>, vector<1x8x128xf32>
    %92 = vector.shape_cast %91 : vector<1x8x128xf32> to vector<8x128xf32>
    %93 = arith.mulf %92, %85 : vector<8x128xf32>
    %c0_42 = arith.constant 0 : index
    %c0_43 = arith.constant 0 : index
    %94 = vector.load %arg6[%c0_42, %c0_43] : memref<128x256xf32, #tpu.memory_space<vmem>>, vector<128x256xf32>
    %cst_44 = arith.constant dense<0.000000e+00> : vector<8x256xf32>
    %95 = tpu.matmul %93, %94, %cst_44 {dimension_numbers = #tpu.dot_dimension_numbers<[1], [0], [0], [1], [0, 0, 1, 1], [], []>} : vector<8x128xf32>, vector<128x256xf32>, vector<8x256xf32> -> vector<8x256xf32>
    %96 = arith.index_cast %c2_i32 : i32 to index
    %c0_45 = arith.constant 0 : index
    %c0_46 = arith.constant 0 : index
    %97 = vector.load %arg2[%96, %c0_45, %c0_46] : memref<8x8x128xf32, #tpu.memory_space<vmem>>, vector<1x8x128xf32>
    %98 = vector.shape_cast %97 : vector<1x8x128xf32> to vector<8x128xf32>
    %99 = vector.extract_strided_slice %95 {offsets = [0, 0], sizes = [8, 128], strides = [1, 1]} : vector<8x256xf32> to vector<8x128xf32>
    %100 = arith.addf %98, %99 : vector<8x128xf32>
    %101 = arith.negf %100 : vector<8x128xf32>
    %102 = math.exp %101 : vector<8x128xf32>
    %cst_47 = arith.constant 1.000000e+00 : f32
    %103 = vector.broadcast %cst_47 : f32 to vector<8x128xf32>
    %104 = arith.addf %103, %102 : vector<8x128xf32>
    %105 = arith.divf %103, %104 : vector<8x128xf32>
    %106 = arith.index_cast %c2_i32 : i32 to index
    %c0_48 = arith.constant 0 : index
    %c0_49 = arith.constant 0 : index
    %107 = vector.load %arg3[%106, %c0_48, %c0_49] : memref<8x8x128xf32, #tpu.memory_space<vmem>>, vector<1x8x128xf32>
    %108 = vector.shape_cast %107 : vector<1x8x128xf32> to vector<8x128xf32>
    %109 = vector.extract_strided_slice %95 {offsets = [0, 128], sizes = [8, 128], strides = [1, 1]} : vector<8x256xf32> to vector<8x128xf32>
    %110 = arith.addf %108, %109 : vector<8x128xf32>
    %111 = arith.negf %110 : vector<8x128xf32>
    %112 = math.exp %111 : vector<8x128xf32>
    %cst_50 = arith.constant 1.000000e+00 : f32
    %113 = vector.broadcast %cst_50 : f32 to vector<8x128xf32>
    %114 = arith.addf %113, %112 : vector<8x128xf32>
    %115 = arith.divf %113, %114 : vector<8x128xf32>
    %116 = arith.index_cast %c2_i32 : i32 to index
    %c0_51 = arith.constant 0 : index
    %c0_52 = arith.constant 0 : index
    %117 = vector.load %arg4[%116, %c0_51, %c0_52] : memref<8x8x128xf32, #tpu.memory_space<vmem>>, vector<1x8x128xf32>
    %118 = vector.shape_cast %117 : vector<1x8x128xf32> to vector<8x128xf32>
    %119 = arith.mulf %115, %93 : vector<8x128xf32>
    %c0_53 = arith.constant 0 : index
    %c0_54 = arith.constant 0 : index
    %120 = vector.load %arg7[%c0_53, %c0_54] : memref<128x128xf32, #tpu.memory_space<vmem>>, vector<128x128xf32>
    %cst_55 = arith.constant dense<0.000000e+00> : vector<8x128xf32>
    %121 = tpu.matmul %119, %120, %cst_55 {dimension_numbers = #tpu.dot_dimension_numbers<[1], [0], [0], [1], [0, 0, 1, 1], [], []>} : vector<8x128xf32>, vector<128x128xf32>, vector<8x128xf32> -> vector<8x128xf32>
    %122 = arith.addf %118, %121 : vector<8x128xf32>
    %123 = math.tanh %122 : vector<8x128xf32>
    %cst_56 = arith.constant 1.000000e+00 : f32
    %124 = vector.broadcast %cst_56 : f32 to vector<8x128xf32>
    %125 = arith.subf %124, %105 : vector<8x128xf32>
    %126 = arith.mulf %125, %93 : vector<8x128xf32>
    %127 = arith.mulf %105, %123 : vector<8x128xf32>
    %128 = arith.addf %126, %127 : vector<8x128xf32>
    %129 = arith.index_cast %c2_i32 : i32 to index
    %c0_57 = arith.constant 0 : index
    %c0_58 = arith.constant 0 : index
    %130 = vector.load %arg8[%129, %c0_57, %c0_58] : memref<8x8x128xf32, #tpu.memory_space<vmem>>, vector<1x8x128xf32>
    %131 = vector.shape_cast %130 : vector<1x8x128xf32> to vector<8x128xf32>
    %132 = vector.shape_cast %128 : vector<8x128xf32> to vector<1x8x128xf32>
    tpu.vector_store %arg8[%129, %c0_57, %c0_58], %132 {strides = array<i32>} : memref<8x8x128xf32, #tpu.memory_space<vmem>>, vector<1x8x128xf32>,
    %c3_i32 = arith.constant 3 : i32
    %133 = arith.index_cast %c3_i32 : i32 to index
    %c0_59 = arith.constant 0 : index
    %c0_60 = arith.constant 0 : index
    %134 = vector.load %arg5[%133, %c0_59, %c0_60] : memref<8x8x128xf32, #tpu.memory_space<vmem>>, vector<1x8x128xf32>
    %135 = vector.shape_cast %134 : vector<1x8x128xf32> to vector<8x128xf32>
    %136 = arith.mulf %135, %128 : vector<8x128xf32>
    %c0_61 = arith.constant 0 : index
    %c0_62 = arith.constant 0 : index
    %137 = vector.load %arg6[%c0_61, %c0_62] : memref<128x256xf32, #tpu.memory_space<vmem>>, vector<128x256xf32>
    %cst_63 = arith.constant dense<0.000000e+00> : vector<8x256xf32>
    %138 = tpu.matmul %136, %137, %cst_63 {dimension_numbers = #tpu.dot_dimension_numbers<[1], [0], [0], [1], [0, 0, 1, 1], [], []>} : vector<8x128xf32>, vector<128x256xf32>, vector<8x256xf32> -> vector<8x256xf32>
    %139 = arith.index_cast %c3_i32 : i32 to index
    %c0_64 = arith.constant 0 : index
    %c0_65 = arith.constant 0 : index
    %140 = vector.load %arg2[%139, %c0_64, %c0_65] : memref<8x8x128xf32, #tpu.memory_space<vmem>>, vector<1x8x128xf32>
    %141 = vector.shape_cast %140 : vector<1x8x128xf32> to vector<8x128xf32>
    %142 = vector.extract_strided_slice %138 {offsets = [0, 0], sizes = [8, 128], strides = [1, 1]} : vector<8x256xf32> to vector<8x128xf32>
    %143 = arith.addf %141, %142 : vector<8x128xf32>
    %144 = arith.negf %143 : vector<8x128xf32>
    %145 = math.exp %144 : vector<8x128xf32>
    %cst_66 = arith.constant 1.000000e+00 : f32
    %146 = vector.broadcast %cst_66 : f32 to vector<8x128xf32>
    %147 = arith.addf %146, %145 : vector<8x128xf32>
    %148 = arith.divf %146, %147 : vector<8x128xf32>
    %149 = arith.index_cast %c3_i32 : i32 to index
    %c0_67 = arith.constant 0 : index
    %c0_68 = arith.constant 0 : index
    %150 = vector.load %arg3[%149, %c0_67, %c0_68] : memref<8x8x128xf32, #tpu.memory_space<vmem>>, vector<1x8x128xf32>
    %151 = vector.shape_cast %150 : vector<1x8x128xf32> to vector<8x128xf32>
    %152 = vector.extract_strided_slice %138 {offsets = [0, 128], sizes = [8, 128], strides = [1, 1]} : vector<8x256xf32> to vector<8x128xf32>
    %153 = arith.addf %151, %152 : vector<8x128xf32>
    %154 = arith.negf %153 : vector<8x128xf32>
    %155 = math.exp %154 : vector<8x128xf32>
    %cst_69 = arith.constant 1.000000e+00 : f32
    %156 = vector.broadcast %cst_69 : f32 to vector<8x128xf32>
    %157 = arith.addf %156, %155 : vector<8x128xf32>
    %158 = arith.divf %156, %157 : vector<8x128xf32>
    %159 = arith.index_cast %c3_i32 : i32 to index
    %c0_70 = arith.constant 0 : index
    %c0_71 = arith.constant 0 : index
    %160 = vector.load %arg4[%159, %c0_70, %c0_71] : memref<8x8x128xf32, #tpu.memory_space<vmem>>, vector<1x8x128xf32>
    %161 = vector.shape_cast %160 : vector<1x8x128xf32> to vector<8x128xf32>
    %162 = arith.mulf %158, %136 : vector<8x128xf32>
    %c0_72 = arith.constant 0 : index
    %c0_73 = arith.constant 0 : index
    %163 = vector.load %arg7[%c0_72, %c0_73] : memref<128x128xf32, #tpu.memory_space<vmem>>, vector<128x128xf32>
    %cst_74 = arith.constant dense<0.000000e+00> : vector<8x128xf32>
    %164 = tpu.matmul %162, %163, %cst_74 {dimension_numbers = #tpu.dot_dimension_numbers<[1], [0], [0], [1], [0, 0, 1, 1], [], []>} : vector<8x128xf32>, vector<128x128xf32>, vector<8x128xf32> -> vector<8x128xf32>
    %165 = arith.addf %161, %164 : vector<8x128xf32>
    %166 = math.tanh %165 : vector<8x128xf32>
    %cst_75 = arith.constant 1.000000e+00 : f32
    %167 = vector.broadcast %cst_75 : f32 to vector<8x128xf32>
    %168 = arith.subf %167, %148 : vector<8x128xf32>
    %169 = arith.mulf %168, %136 : vector<8x128xf32>
    %170 = arith.mulf %148, %166 : vector<8x128xf32>
    %171 = arith.addf %169, %170 : vector<8x128xf32>
    %172 = arith.index_cast %c3_i32 : i32 to index
    %c0_76 = arith.constant 0 : index
    %c0_77 = arith.constant 0 : index
    %173 = vector.load %arg8[%172, %c0_76, %c0_77] : memref<8x8x128xf32, #tpu.memory_space<vmem>>, vector<1x8x128xf32>
    %174 = vector.shape_cast %173 : vector<1x8x128xf32> to vector<8x128xf32>
    %175 = vector.shape_cast %171 : vector<8x128xf32> to vector<1x8x128xf32>
    tpu.vector_store %arg8[%172, %c0_76, %c0_77], %175 {strides = array<i32>} : memref<8x8x128xf32, #tpu.memory_space<vmem>>, vector<1x8x128xf32>,
    %c4_i32 = arith.constant 4 : i32
    %176 = arith.index_cast %c4_i32 : i32 to index
    %c0_78 = arith.constant 0 : index
    %c0_79 = arith.constant 0 : index
    %177 = vector.load %arg5[%176, %c0_78, %c0_79] : memref<8x8x128xf32, #tpu.memory_space<vmem>>, vector<1x8x128xf32>
    %178 = vector.shape_cast %177 : vector<1x8x128xf32> to vector<8x128xf32>
    %179 = arith.mulf %178, %171 : vector<8x128xf32>
    %c0_80 = arith.constant 0 : index
    %c0_81 = arith.constant 0 : index
    %180 = vector.load %arg6[%c0_80, %c0_81] : memref<128x256xf32, #tpu.memory_space<vmem>>, vector<128x256xf32>
    %cst_82 = arith.constant dense<0.000000e+00> : vector<8x256xf32>
    %181 = tpu.matmul %179, %180, %cst_82 {dimension_numbers = #tpu.dot_dimension_numbers<[1], [0], [0], [1], [0, 0, 1, 1], [], []>} : vector<8x128xf32>, vector<128x256xf32>, vector<8x256xf32> -> vector<8x256xf32>
    %182 = arith.index_cast %c4_i32 : i32 to index
    %c0_83 = arith.constant 0 : index
    %c0_84 = arith.constant 0 : index
    %183 = vector.load %arg2[%182, %c0_83, %c0_84] : memref<8x8x128xf32, #tpu.memory_space<vmem>>, vector<1x8x128xf32>
    %184 = vector.shape_cast %183 : vector<1x8x128xf32> to vector<8x128xf32>
    %185 = vector.extract_strided_slice %181 {offsets = [0, 0], sizes = [8, 128], strides = [1, 1]} : vector<8x256xf32> to vector<8x128xf32>
    %186 = arith.addf %184, %185 : vector<8x128xf32>
    %187 = arith.negf %186 : vector<8x128xf32>
    %188 = math.exp %187 : vector<8x128xf32>
    %cst_85 = arith.constant 1.000000e+00 : f32
    %189 = vector.broadcast %cst_85 : f32 to vector<8x128xf32>
    %190 = arith.addf %189, %188 : vector<8x128xf32>
    %191 = arith.divf %189, %190 : vector<8x128xf32>
    %192 = arith.index_cast %c4_i32 : i32 to index
    %c0_86 = arith.constant 0 : index
    %c0_87 = arith.constant 0 : index
    %193 = vector.load %arg3[%192, %c0_86, %c0_87] : memref<8x8x128xf32, #tpu.memory_space<vmem>>, vector<1x8x128xf32>
    %194 = vector.shape_cast %193 : vector<1x8x128xf32> to vector<8x128xf32>
    %195 = vector.extract_strided_slice %181 {offsets = [0, 128], sizes = [8, 128], strides = [1, 1]} : vector<8x256xf32> to vector<8x128xf32>
    %196 = arith.addf %194, %195 : vector<8x128xf32>
    %197 = arith.negf %196 : vector<8x128xf32>
    %198 = math.exp %197 : vector<8x128xf32>
    %cst_88 = arith.constant 1.000000e+00 : f32
    %199 = vector.broadcast %cst_88 : f32 to vector<8x128xf32>
    %200 = arith.addf %199, %198 : vector<8x128xf32>
    %201 = arith.divf %199, %200 : vector<8x128xf32>
    %202 = arith.index_cast %c4_i32 : i32 to index
    %c0_89 = arith.constant 0 : index
    %c0_90 = arith.constant 0 : index
    %203 = vector.load %arg4[%202, %c0_89, %c0_90] : memref<8x8x128xf32, #tpu.memory_space<vmem>>, vector<1x8x128xf32>
    %204 = vector.shape_cast %203 : vector<1x8x128xf32> to vector<8x128xf32>
    %205 = arith.mulf %201, %179 : vector<8x128xf32>
    %c0_91 = arith.constant 0 : index
    %c0_92 = arith.constant 0 : index
    %206 = vector.load %arg7[%c0_91, %c0_92] : memref<128x128xf32, #tpu.memory_space<vmem>>, vector<128x128xf32>
    %cst_93 = arith.constant dense<0.000000e+00> : vector<8x128xf32>
    %207 = tpu.matmul %205, %206, %cst_93 {dimension_numbers = #tpu.dot_dimension_numbers<[1], [0], [0], [1], [0, 0, 1, 1], [], []>} : vector<8x128xf32>, vector<128x128xf32>, vector<8x128xf32> -> vector<8x128xf32>
    %208 = arith.addf %204, %207 : vector<8x128xf32>
    %209 = math.tanh %208 : vector<8x128xf32>
    %cst_94 = arith.constant 1.000000e+00 : f32
    %210 = vector.broadcast %cst_94 : f32 to vector<8x128xf32>
    %211 = arith.subf %210, %191 : vector<8x128xf32>
    %212 = arith.mulf %211, %179 : vector<8x128xf32>
    %213 = arith.mulf %191, %209 : vector<8x128xf32>
    %214 = arith.addf %212, %213 : vector<8x128xf32>
    %215 = arith.index_cast %c4_i32 : i32 to index
    %c0_95 = arith.constant 0 : index
    %c0_96 = arith.constant 0 : index
    %216 = vector.load %arg8[%215, %c0_95, %c0_96] : memref<8x8x128xf32, #tpu.memory_space<vmem>>, vector<1x8x128xf32>
    %217 = vector.shape_cast %216 : vector<1x8x128xf32> to vector<8x128xf32>
    %218 = vector.shape_cast %214 : vector<8x128xf32> to vector<1x8x128xf32>
    tpu.vector_store %arg8[%215, %c0_95, %c0_96], %218 {strides = array<i32>} : memref<8x8x128xf32, #tpu.memory_space<vmem>>, vector<1x8x128xf32>,
    %c5_i32 = arith.constant 5 : i32
    %219 = arith.index_cast %c5_i32 : i32 to index
    %c0_97 = arith.constant 0 : index
    %c0_98 = arith.constant 0 : index
    %220 = vector.load %arg5[%219, %c0_97, %c0_98] : memref<8x8x128xf32, #tpu.memory_space<vmem>>, vector<1x8x128xf32>
    %221 = vector.shape_cast %220 : vector<1x8x128xf32> to vector<8x128xf32>
    %222 = arith.mulf %221, %214 : vector<8x128xf32>
    %c0_99 = arith.constant 0 : index
    %c0_100 = arith.constant 0 : index
    %223 = vector.load %arg6[%c0_99, %c0_100] : memref<128x256xf32, #tpu.memory_space<vmem>>, vector<128x256xf32>
    %cst_101 = arith.constant dense<0.000000e+00> : vector<8x256xf32>
    %224 = tpu.matmul %222, %223, %cst_101 {dimension_numbers = #tpu.dot_dimension_numbers<[1], [0], [0], [1], [0, 0, 1, 1], [], []>} : vector<8x128xf32>, vector<128x256xf32>, vector<8x256xf32> -> vector<8x256xf32>
    %225 = arith.index_cast %c5_i32 : i32 to index
    %c0_102 = arith.constant 0 : index
    %c0_103 = arith.constant 0 : index
    %226 = vector.load %arg2[%225, %c0_102, %c0_103] : memref<8x8x128xf32, #tpu.memory_space<vmem>>, vector<1x8x128xf32>
    %227 = vector.shape_cast %226 : vector<1x8x128xf32> to vector<8x128xf32>
    %228 = vector.extract_strided_slice %224 {offsets = [0, 0], sizes = [8, 128], strides = [1, 1]} : vector<8x256xf32> to vector<8x128xf32>
    %229 = arith.addf %227, %228 : vector<8x128xf32>
    %230 = arith.negf %229 : vector<8x128xf32>
    %231 = math.exp %230 : vector<8x128xf32>
    %cst_104 = arith.constant 1.000000e+00 : f32
    %232 = vector.broadcast %cst_104 : f32 to vector<8x128xf32>
    %233 = arith.addf %232, %231 : vector<8x128xf32>
    %234 = arith.divf %232, %233 : vector<8x128xf32>
    %235 = arith.index_cast %c5_i32 : i32 to index
    %c0_105 = arith.constant 0 : index
    %c0_106 = arith.constant 0 : index
    %236 = vector.load %arg3[%235, %c0_105, %c0_106] : memref<8x8x128xf32, #tpu.memory_space<vmem>>, vector<1x8x128xf32>
    %237 = vector.shape_cast %236 : vector<1x8x128xf32> to vector<8x128xf32>
    %238 = vector.extract_strided_slice %224 {offsets = [0, 128], sizes = [8, 128], strides = [1, 1]} : vector<8x256xf32> to vector<8x128xf32>
    %239 = arith.addf %237, %238 : vector<8x128xf32>
    %240 = arith.negf %239 : vector<8x128xf32>
    %241 = math.exp %240 : vector<8x128xf32>
    %cst_107 = arith.constant 1.000000e+00 : f32
    %242 = vector.broadcast %cst_107 : f32 to vector<8x128xf32>
    %243 = arith.addf %242, %241 : vector<8x128xf32>
    %244 = arith.divf %242, %243 : vector<8x128xf32>
    %245 = arith.index_cast %c5_i32 : i32 to index
    %c0_108 = arith.constant 0 : index
    %c0_109 = arith.constant 0 : index
    %246 = vector.load %arg4[%245, %c0_108, %c0_109] : memref<8x8x128xf32, #tpu.memory_space<vmem>>, vector<1x8x128xf32>
    %247 = vector.shape_cast %246 : vector<1x8x128xf32> to vector<8x128xf32>
    %248 = arith.mulf %244, %222 : vector<8x128xf32>
    %c0_110 = arith.constant 0 : index
    %c0_111 = arith.constant 0 : index
    %249 = vector.load %arg7[%c0_110, %c0_111] : memref<128x128xf32, #tpu.memory_space<vmem>>, vector<128x128xf32>
    %cst_112 = arith.constant dense<0.000000e+00> : vector<8x128xf32>
    %250 = tpu.matmul %248, %249, %cst_112 {dimension_numbers = #tpu.dot_dimension_numbers<[1], [0], [0], [1], [0, 0, 1, 1], [], []>} : vector<8x128xf32>, vector<128x128xf32>, vector<8x128xf32> -> vector<8x128xf32>
    %251 = arith.addf %247, %250 : vector<8x128xf32>
    %252 = math.tanh %251 : vector<8x128xf32>
    %cst_113 = arith.constant 1.000000e+00 : f32
    %253 = vector.broadcast %cst_113 : f32 to vector<8x128xf32>
    %254 = arith.subf %253, %234 : vector<8x128xf32>
    %255 = arith.mulf %254, %222 : vector<8x128xf32>
    %256 = arith.mulf %234, %252 : vector<8x128xf32>
    %257 = arith.addf %255, %256 : vector<8x128xf32>
    %258 = arith.index_cast %c5_i32 : i32 to index
    %c0_114 = arith.constant 0 : index
    %c0_115 = arith.constant 0 : index
    %259 = vector.load %arg8[%258, %c0_114, %c0_115] : memref<8x8x128xf32, #tpu.memory_space<vmem>>, vector<1x8x128xf32>
    %260 = vector.shape_cast %259 : vector<1x8x128xf32> to vector<8x128xf32>
    %261 = vector.shape_cast %257 : vector<8x128xf32> to vector<1x8x128xf32>
    tpu.vector_store %arg8[%258, %c0_114, %c0_115], %261 {strides = array<i32>} : memref<8x8x128xf32, #tpu.memory_space<vmem>>, vector<1x8x128xf32>,
    %c6_i32 = arith.constant 6 : i32
    %262 = arith.index_cast %c6_i32 : i32 to index
    %c0_116 = arith.constant 0 : index
    %c0_117 = arith.constant 0 : index
    %263 = vector.load %arg5[%262, %c0_116, %c0_117] : memref<8x8x128xf32, #tpu.memory_space<vmem>>, vector<1x8x128xf32>
    %264 = vector.shape_cast %263 : vector<1x8x128xf32> to vector<8x128xf32>
    %265 = arith.mulf %264, %257 : vector<8x128xf32>
    %c0_118 = arith.constant 0 : index
    %c0_119 = arith.constant 0 : index
    %266 = vector.load %arg6[%c0_118, %c0_119] : memref<128x256xf32, #tpu.memory_space<vmem>>, vector<128x256xf32>
    %cst_120 = arith.constant dense<0.000000e+00> : vector<8x256xf32>
    %267 = tpu.matmul %265, %266, %cst_120 {dimension_numbers = #tpu.dot_dimension_numbers<[1], [0], [0], [1], [0, 0, 1, 1], [], []>} : vector<8x128xf32>, vector<128x256xf32>, vector<8x256xf32> -> vector<8x256xf32>
    %268 = arith.index_cast %c6_i32 : i32 to index
    %c0_121 = arith.constant 0 : index
    %c0_122 = arith.constant 0 : index
    %269 = vector.load %arg2[%268, %c0_121, %c0_122] : memref<8x8x128xf32, #tpu.memory_space<vmem>>, vector<1x8x128xf32>
    %270 = vector.shape_cast %269 : vector<1x8x128xf32> to vector<8x128xf32>
    %271 = vector.extract_strided_slice %267 {offsets = [0, 0], sizes = [8, 128], strides = [1, 1]} : vector<8x256xf32> to vector<8x128xf32>
    %272 = arith.addf %270, %271 : vector<8x128xf32>
    %273 = arith.negf %272 : vector<8x128xf32>
    %274 = math.exp %273 : vector<8x128xf32>
    %cst_123 = arith.constant 1.000000e+00 : f32
    %275 = vector.broadcast %cst_123 : f32 to vector<8x128xf32>
    %276 = arith.addf %275, %274 : vector<8x128xf32>
    %277 = arith.divf %275, %276 : vector<8x128xf32>
    %278 = arith.index_cast %c6_i32 : i32 to index
    %c0_124 = arith.constant 0 : index
    %c0_125 = arith.constant 0 : index
    %279 = vector.load %arg3[%278, %c0_124, %c0_125] : memref<8x8x128xf32, #tpu.memory_space<vmem>>, vector<1x8x128xf32>
    %280 = vector.shape_cast %279 : vector<1x8x128xf32> to vector<8x128xf32>
    %281 = vector.extract_strided_slice %267 {offsets = [0, 128], sizes = [8, 128], strides = [1, 1]} : vector<8x256xf32> to vector<8x128xf32>
    %282 = arith.addf %280, %281 : vector<8x128xf32>
    %283 = arith.negf %282 : vector<8x128xf32>
    %284 = math.exp %283 : vector<8x128xf32>
    %cst_126 = arith.constant 1.000000e+00 : f32
    %285 = vector.broadcast %cst_126 : f32 to vector<8x128xf32>
    %286 = arith.addf %285, %284 : vector<8x128xf32>
    %287 = arith.divf %285, %286 : vector<8x128xf32>
    %288 = arith.index_cast %c6_i32 : i32 to index
    %c0_127 = arith.constant 0 : index
    %c0_128 = arith.constant 0 : index
    %289 = vector.load %arg4[%288, %c0_127, %c0_128] : memref<8x8x128xf32, #tpu.memory_space<vmem>>, vector<1x8x128xf32>
    %290 = vector.shape_cast %289 : vector<1x8x128xf32> to vector<8x128xf32>
    %291 = arith.mulf %287, %265 : vector<8x128xf32>
    %c0_129 = arith.constant 0 : index
    %c0_130 = arith.constant 0 : index
    %292 = vector.load %arg7[%c0_129, %c0_130] : memref<128x128xf32, #tpu.memory_space<vmem>>, vector<128x128xf32>
    %cst_131 = arith.constant dense<0.000000e+00> : vector<8x128xf32>
    %293 = tpu.matmul %291, %292, %cst_131 {dimension_numbers = #tpu.dot_dimension_numbers<[1], [0], [0], [1], [0, 0, 1, 1], [], []>} : vector<8x128xf32>, vector<128x128xf32>, vector<8x128xf32> -> vector<8x128xf32>
    %294 = arith.addf %290, %293 : vector<8x128xf32>
    %295 = math.tanh %294 : vector<8x128xf32>
    %cst_132 = arith.constant 1.000000e+00 : f32
    %296 = vector.broadcast %cst_132 : f32 to vector<8x128xf32>
    %297 = arith.subf %296, %277 : vector<8x128xf32>
    %298 = arith.mulf %297, %265 : vector<8x128xf32>
    %299 = arith.mulf %277, %295 : vector<8x128xf32>
    %300 = arith.addf %298, %299 : vector<8x128xf32>
    %301 = arith.index_cast %c6_i32 : i32 to index
    %c0_133 = arith.constant 0 : index
    %c0_134 = arith.constant 0 : index
    %302 = vector.load %arg8[%301, %c0_133, %c0_134] : memref<8x8x128xf32, #tpu.memory_space<vmem>>, vector<1x8x128xf32>
    %303 = vector.shape_cast %302 : vector<1x8x128xf32> to vector<8x128xf32>
    %304 = vector.shape_cast %300 : vector<8x128xf32> to vector<1x8x128xf32>
    tpu.vector_store %arg8[%301, %c0_133, %c0_134], %304 {strides = array<i32>} : memref<8x8x128xf32, #tpu.memory_space<vmem>>, vector<1x8x128xf32>,
    %c7_i32 = arith.constant 7 : i32
    %305 = arith.index_cast %c7_i32 : i32 to index
    %c0_135 = arith.constant 0 : index
    %c0_136 = arith.constant 0 : index
    %306 = vector.load %arg5[%305, %c0_135, %c0_136] : memref<8x8x128xf32, #tpu.memory_space<vmem>>, vector<1x8x128xf32>
    %307 = vector.shape_cast %306 : vector<1x8x128xf32> to vector<8x128xf32>
    %308 = arith.mulf %307, %300 : vector<8x128xf32>
    %c0_137 = arith.constant 0 : index
    %c0_138 = arith.constant 0 : index
    %309 = vector.load %arg6[%c0_137, %c0_138] : memref<128x256xf32, #tpu.memory_space<vmem>>, vector<128x256xf32>
    %cst_139 = arith.constant dense<0.000000e+00> : vector<8x256xf32>
    %310 = tpu.matmul %308, %309, %cst_139 {dimension_numbers = #tpu.dot_dimension_numbers<[1], [0], [0], [1], [0, 0, 1, 1], [], []>} : vector<8x128xf32>, vector<128x256xf32>, vector<8x256xf32> -> vector<8x256xf32>
    %311 = arith.index_cast %c7_i32 : i32 to index
    %c0_140 = arith.constant 0 : index
    %c0_141 = arith.constant 0 : index
    %312 = vector.load %arg2[%311, %c0_140, %c0_141] : memref<8x8x128xf32, #tpu.memory_space<vmem>>, vector<1x8x128xf32>
    %313 = vector.shape_cast %312 : vector<1x8x128xf32> to vector<8x128xf32>
    %314 = vector.extract_strided_slice %310 {offsets = [0, 0], sizes = [8, 128], strides = [1, 1]} : vector<8x256xf32> to vector<8x128xf32>
    %315 = arith.addf %313, %314 : vector<8x128xf32>
    %316 = arith.negf %315 : vector<8x128xf32>
    %317 = math.exp %316 : vector<8x128xf32>
    %cst_142 = arith.constant 1.000000e+00 : f32
    %318 = vector.broadcast %cst_142 : f32 to vector<8x128xf32>
    %319 = arith.addf %318, %317 : vector<8x128xf32>
    %320 = arith.divf %318, %319 : vector<8x128xf32>
    %321 = arith.index_cast %c7_i32 : i32 to index
    %c0_143 = arith.constant 0 : index
    %c0_144 = arith.constant 0 : index
    %322 = vector.load %arg3[%321, %c0_143, %c0_144] : memref<8x8x128xf32, #tpu.memory_space<vmem>>, vector<1x8x128xf32>
    %323 = vector.shape_cast %322 : vector<1x8x128xf32> to vector<8x128xf32>
    %324 = vector.extract_strided_slice %310 {offsets = [0, 128], sizes = [8, 128], strides = [1, 1]} : vector<8x256xf32> to vector<8x128xf32>
    %325 = arith.addf %323, %324 : vector<8x128xf32>
    %326 = arith.negf %325 : vector<8x128xf32>
    %327 = math.exp %326 : vector<8x128xf32>
    %cst_145 = arith.constant 1.000000e+00 : f32
    %328 = vector.broadcast %cst_145 : f32 to vector<8x128xf32>
    %329 = arith.addf %328, %327 : vector<8x128xf32>
    %330 = arith.divf %328, %329 : vector<8x128xf32>
    %331 = arith.index_cast %c7_i32 : i32 to index
    %c0_146 = arith.constant 0 : index
    %c0_147 = arith.constant 0 : index
    %332 = vector.load %arg4[%331, %c0_146, %c0_147] : memref<8x8x128xf32, #tpu.memory_space<vmem>>, vector<1x8x128xf32>
    %333 = vector.shape_cast %332 : vector<1x8x128xf32> to vector<8x128xf32>
    %334 = arith.mulf %330, %308 : vector<8x128xf32>
    %c0_148 = arith.constant 0 : index
    %c0_149 = arith.constant 0 : index
    %335 = vector.load %arg7[%c0_148, %c0_149] : memref<128x128xf32, #tpu.memory_space<vmem>>, vector<128x128xf32>
    %cst_150 = arith.constant dense<0.000000e+00> : vector<8x128xf32>
    %336 = tpu.matmul %334, %335, %cst_150 {dimension_numbers = #tpu.dot_dimension_numbers<[1], [0], [0], [1], [0, 0, 1, 1], [], []>} : vector<8x128xf32>, vector<128x128xf32>, vector<8x128xf32> -> vector<8x128xf32>
    %337 = arith.addf %333, %336 : vector<8x128xf32>
    %338 = math.tanh %337 : vector<8x128xf32>
    %cst_151 = arith.constant 1.000000e+00 : f32
    %339 = vector.broadcast %cst_151 : f32 to vector<8x128xf32>
    %340 = arith.subf %339, %320 : vector<8x128xf32>
    %341 = arith.mulf %340, %308 : vector<8x128xf32>
    %342 = arith.mulf %320, %338 : vector<8x128xf32>
    %343 = arith.addf %341, %342 : vector<8x128xf32>
    %344 = arith.index_cast %c7_i32 : i32 to index
    %c0_152 = arith.constant 0 : index
    %c0_153 = arith.constant 0 : index
    %345 = vector.load %arg8[%344, %c0_152, %c0_153] : memref<8x8x128xf32, #tpu.memory_space<vmem>>, vector<1x8x128xf32>
    %346 = vector.shape_cast %345 : vector<1x8x128xf32> to vector<8x128xf32>
    %347 = vector.shape_cast %343 : vector<8x128xf32> to vector<1x8x128xf32>
    tpu.vector_store %arg8[%344, %c0_152, %c0_153], %347 {strides = array<i32>} : memref<8x8x128xf32, #tpu.memory_space<vmem>>, vector<1x8x128xf32>,
    %c8_i32 = arith.constant 8 : i32
    %c0_154 = arith.constant 0 : index
    %c0_155 = arith.constant 0 : index
    %348 = vector.load %arg9[%c0_154, %c0_155] : memref<8x128xf32, #tpu.memory_space<vmem>>, vector<8x128xf32>
    tpu.vector_store %arg9[%c0_154, %c0_155], %343 {strides = array<i32>} : memref<8x128xf32, #tpu.memory_space<vmem>>, vector<8x128xf32>,
    return
  }
  func.func @transform_0(%arg0: i32, %arg1: i32) -> (i32, i32, i32) {
    %c0_i32 = arith.constant 0 : i32
    %c0_i32_0 = arith.constant 0 : i32
    return %arg1, %arg0, %c0_i32 : i32, i32, i32
  }
  func.func @transform_1(%arg0: i32, %arg1: i32) -> (i32, i32, i32) {
    %c0_i32 = arith.constant 0 : i32
    %c0_i32_0 = arith.constant 0 : i32
    return %arg1, %arg0, %c0_i32 : i32, i32, i32
  }
  func.func @transform_2(%arg0: i32, %arg1: i32) -> (i32, i32, i32) {
    %c0_i32 = arith.constant 0 : i32
    %c0_i32_0 = arith.constant 0 : i32
    return %arg1, %arg0, %c0_i32 : i32, i32, i32
  }
  func.func @transform_3(%arg0: i32, %arg1: i32) -> (i32, i32, i32) {
    %c0_i32 = arith.constant 0 : i32
    %c0_i32_0 = arith.constant 0 : i32
    return %arg1, %arg0, %c0_i32 : i32, i32, i32
  }
  func.func @transform_4(%arg0: i32, %arg1: i32) -> (i32, i32) {
    %c0_i32 = arith.constant 0 : i32
    %c0_i32_0 = arith.constant 0 : i32
    %c0_i32_1 = arith.constant 0 : i32
    return %c0_i32, %c0_i32_0 : i32, i32
  }
  func.func @transform_5(%arg0: i32, %arg1: i32) -> (i32, i32) {
    %c0_i32 = arith.constant 0 : i32
    %c0_i32_0 = arith.constant 0 : i32
    %c0_i32_1 = arith.constant 0 : i32
    return %c0_i32, %c0_i32_0 : i32, i32
  }
  func.func @transform_6(%arg0: i32, %arg1: i32) -> (i32, i32, i32) {
    %c0_i32 = arith.constant 0 : i32
    %c0_i32_0 = arith.constant 0 : i32
    return %arg1, %arg0, %c0_i32 : i32, i32, i32
  }
}

</mosaic_0001>

<llo_original>
// kernel: tpu_custom_call.1
$region0: #{tpu_custom_call.1}
  #allocation0 [shape = 'u32[]', space=smem, size = 0x4, offset = 0x4, fixed_abs, tag = 'smem constant byte address 0x4 - core index']
  #allocation1 [shape = 'u32[144,128]{1,0:T(1,128)}', space=vmem, size = 0x12000, scoped, tag = 'internal scratch']
  #allocation2 [shape = 'f32[8,128]{1,0:T(8,128)}', space=vmem, size = 0x1000, scoped, tag = 'scratch operand']
  %s0 = inlined_call_operand.hbm [shape: f32[8,8,128], index: 0, kind: input, shape index: {}]
  %s1 = inlined_call_operand.hbm [shape: f32[8,8,128], index: 1, kind: input, shape index: {}]
  %s2 = inlined_call_operand.hbm [shape: f32[8,8,128], index: 2, kind: input, shape index: {}]
  %s3 = inlined_call_operand.hbm [shape: f32[8,8,128], index: 3, kind: input, shape index: {}]
  %s4 = inlined_call_operand.hbm [shape: f32[128,256], index: 4, kind: input, shape index: {}]
  %s5 = inlined_call_operand.hbm [shape: f32[128,128], index: 5, kind: input, shape index: {}]
  %s6 = inlined_call_operand.hbm [shape: f32[8,8,128], index: 6, kind: output, shape index: {}]
  %s7 = sld [smem:[#allocation0]]
  $region62: #{tpu_custom_call.1} parent=0
    _
  %s9 = ssub.s32 1, %s7
  %s10 = scalar_select 0, %s9, %s7
  $region1: #{tpu_custom_call.1} parent=0
    #allocation3 [shape = 'u8[32768]{0}', space=vmem, size = 0x8000, scoped, tag = 'input window, operand 0, single buffered']
    #allocation4 [shape = 's32[1]{0}', space=sflag, size = 0x4, scoped, tag = 'scoped memory for tpu_custom_call.1']
    #allocation5 [shape = 's32[1]{0}', space=sflag, size = 0x4, scoped, tag = 'scoped memory for tpu_custom_call.1']
    #allocation6 [shape = 'u8[32768]{0}', space=vmem, size = 0x8000, scoped, tag = 'input window, operand 1, single buffered']
    #allocation7 [shape = 's32[1]{0}', space=sflag, size = 0x4, scoped, tag = 'scoped memory for tpu_custom_call.1']
    #allocation8 [shape = 'u8[32768]{0}', space=vmem, size = 0x8000, scoped, tag = 'input window, operand 2, single buffered']
    #allocation9 [shape = 'u8[32768]{0}', space=vmem, size = 0x8000, scoped, tag = 'input window, operand 3, single buffered']
    #allocation10 [shape = 's32[1]{0}', space=sflag, size = 0x4, scoped, tag = 'scoped memory for tpu_custom_call.1']
    #allocation11 [shape = 'u8[131072]{0}', space=vmem, size = 0x20000, scoped, tag = 'input window, operand 4, single buffered']
    #allocation12 [shape = 'u8[65536]{0}', space=vmem, size = 0x10000, scoped, tag = 'input window, operand 5, single buffered']
    #allocation13 [shape = 's32[1]{0}', space=sflag, size = 0x4, scoped, tag = 'scoped memory for tpu_custom_call.1']
    #allocation14 [shape = 'u8[32768]{0}', space=vmem, size = 0x8000, scoped, tag = 'output window, operand 0, single buffered']
    %11 = vsyncpa [#allocation4], 0
    %12 = vsyncpa [#allocation7], 0
    %13 = vsyncpa [#allocation10], 0
    %14 = vsyncpa [#allocation13], 0
    %15 = vsyncpa [#allocation5], 0
    // Predicated region
    $region2: #{tpu_custom_call.1} parent=1 // pred_check
      _
    $region3: #{tpu_custom_call.1} parent=1 // pred_check_branch
      %17 = sbr.rel (0) target = $region5
    $region4: #{tpu_custom_call.1} parent=1 // pred_region
      %s19 = ssub.s32 1024, 1024
      %20 = vsyncadd [#allocation4], %s19
      %s21 = sshll.u32 [#allocation3], 4
      %s22 = int_to_ptr.vmem [resolvable:$true] %s21
      %27 = dma.hbm_to_vmem [thread:$0]  %s0, 1024, %s22, [#allocation4], 128, 128, 8
    $region5: #{tpu_custom_call.1} parent=1 // pred_fallthru
      _
    // Predicated region
    $region6: #{tpu_custom_call.1} parent=1 // pred_check
      _
    $region7: #{tpu_custom_call.1} parent=1 // pred_check_branch
      %29 = sbr.rel (0) target = $region9
    $region8: #{tpu_custom_call.1} parent=1 // pred_region
      %s31 = ssub.s32 1024, 1024
      %32 = vsyncadd [#allocation7], %s31
      %s33 = sshll.u32 [#allocation6], 4
      %s34 = int_to_ptr.vmem [resolvable:$true] %s33
      %39 = dma.hbm_to_vmem [thread:$0]  %s1, 1024, %s34, [#allocation7], 128, 128, 8
    $region9: #{tpu_custom_call.1} parent=1 // pred_fallthru
      _
    // Predicated region
    $region10: #{tpu_custom_call.1} parent=1 // pred_check
      _
    $region11: #{tpu_custom_call.1} parent=1 // pred_check_branch
      %41 = sbr.rel (0) target = $region13
    $region12: #{tpu_custom_call.1} parent=1 // pred_region
      %s43 = ssub.s32 1024, 1024
      %44 = vsyncadd [#allocation7], %s43
      %s45 = sshll.u32 [#allocation8], 4
      %s46 = int_to_ptr.vmem [resolvable:$true] %s45
      %51 = dma.hbm_to_vmem [thread:$0]  %s2, 1024, %s46, [#allocation7], 128, 128, 8
    $region13: #{tpu_custom_call.1} parent=1 // pred_fallthru
      _
    // Predicated region
    $region14: #{tpu_custom_call.1} parent=1 // pred_check
      _
    $region15: #{tpu_custom_call.1} parent=1 // pred_check_branch
      %53 = sbr.rel (0) target = $region17
    $region16: #{tpu_custom_call.1} parent=1 // pred_region
      %s55 = ssub.s32 1024, 1024
      %56 = vsyncadd [#allocation10], %s55
      %s57 = sshll.u32 [#allocation9], 4
      %s58 = int_to_ptr.vmem [resolvable:$true] %s57
      %63 = dma.hbm_to_vmem [thread:$0]  %s3, 1024, %s58, [#allocation10], 128, 128, 8
    $region17: #{tpu_custom_call.1} parent=1 // pred_fallthru
      _
    // Predicated region
    $region18: #{tpu_custom_call.1} parent=1 // pred_check
      _
    $region19: #{tpu_custom_call.1} parent=1 // pred_check_branch
      %65 = sbr.rel (0) target = $region21
    $region20: #{tpu_custom_call.1} parent=1 // pred_region
      %s67 = ssub.s32 4096, 4096
      %68 = vsyncadd [#allocation10], %s67
      %s69 = sshll.u32 [#allocation11], 4
      %s70 = int_to_ptr.vmem [resolvable:$true] %s69
      %75 = dma.hbm_to_vmem [thread:$0]  %s4, 4096, %s70, [#allocation10], 256, 256, 16
    $region21: #{tpu_custom_call.1} parent=1 // pred_fallthru
      _
    // Predicated region
    $region22: #{tpu_custom_call.1} parent=1 // pred_check
      _
    $region23: #{tpu_custom_call.1} parent=1 // pred_check_branch
      %77 = sbr.rel (0) target = $region25
    $region24: #{tpu_custom_call.1} parent=1 // pred_region
      %s79 = ssub.s32 2048, 2048
      %80 = vsyncadd [#allocation13], %s79
      %s81 = sshll.u32 [#allocation12], 4
      %s82 = int_to_ptr.vmem [resolvable:$true] %s81
      %87 = dma.hbm_to_vmem [thread:$0]  %s5, 2048, %s82, [#allocation13], 128, 128, 8
    $region25: #{tpu_custom_call.1} parent=1 // pred_fallthru
      _
    // Predicated region
    $region26: #{tpu_custom_call.1} parent=1 // pred_check
      _
    $region27: #{tpu_custom_call.1} parent=1 // pred_check_branch
      %89 = sbr.rel (0) target = $region29
    $region28: #{tpu_custom_call.1} parent=1 // pred_region
      %90 = dma.done [#allocation4], 1024
    $region29: #{tpu_custom_call.1} parent=1 // pred_fallthru
      _
    // Predicated region
    $region30: #{tpu_custom_call.1} parent=1 // pred_check
      _
    $region31: #{tpu_custom_call.1} parent=1 // pred_check_branch
      %92 = sbr.rel (0) target = $region33
    $region32: #{tpu_custom_call.1} parent=1 // pred_region
      %93 = dma.done [#allocation7], 1024
    $region33: #{tpu_custom_call.1} parent=1 // pred_fallthru
      _
    // Predicated region
    $region34: #{tpu_custom_call.1} parent=1 // pred_check
      _
    $region35: #{tpu_custom_call.1} parent=1 // pred_check_branch
      %95 = sbr.rel (0) target = $region37
    $region36: #{tpu_custom_call.1} parent=1 // pred_region
      %96 = dma.done [#allocation7], 1024
    $region37: #{tpu_custom_call.1} parent=1 // pred_fallthru
      _
    // Predicated region
    $region38: #{tpu_custom_call.1} parent=1 // pred_check
      _
    $region39: #{tpu_custom_call.1} parent=1 // pred_check_branch
      %98 = sbr.rel (0) target = $region41
    $region40: #{tpu_custom_call.1} parent=1 // pred_region
      %99 = dma.done [#allocation10], 1024
    $region41: #{tpu_custom_call.1} parent=1 // pred_fallthru
      _
    // Predicated region
    $region42: #{tpu_custom_call.1} parent=1 // pred_check
      _
    $region43: #{tpu_custom_call.1} parent=1 // pred_check_branch
      %101 = sbr.rel (0) target = $region45
    $region44: #{tpu_custom_call.1} parent=1 // pred_region
      %102 = dma.done [#allocation10], 4096
    $region45: #{tpu_custom_call.1} parent=1 // pred_fallthru
      _
    // Predicated region
    $region46: #{tpu_custom_call.1} parent=1 // pred_check
      _
    $region47: #{tpu_custom_call.1} parent=1 // pred_check_branch
      %104 = sbr.rel (0) target = $region49
    $region48: #{tpu_custom_call.1} parent=1 // pred_region
      %105 = dma.done [#allocation13], 2048
    $region49: #{tpu_custom_call.1} parent=1 // pred_fallthru
      _
    %p106 = scmp.eq.s32.totalorder 0, 0
    // Predicated region
    $region50: #{tpu_custom_call.1} parent=1 // pred_check
      %p107 = pneg %p106
    $region51: #{tpu_custom_call.1} parent=1 // pred_check_branch
      %109 = sbr.rel (%p107) target = $region53
    $region52: #{tpu_custom_call.1} parent=1 // pred_region
      %110 = vst [vmem:[#allocation2] sm:$0xff] 0.0
    $region53: #{tpu_custom_call.1} parent=1 // pred_fallthru
      _
    %v111 = vld [vmem:[#allocation2] sm:$0xff]
    %v112 = vld [vmem:[#allocation9] sm:$0xff]
    %v113 = vmul.f32 %v112, %v111
    %v114 = vld [vmem:[#allocation11] sm:$0xff]
    %v115 = vld [vmem:[#allocation11 + $0x8] sm:$0xff]
    %v116 = vld [vmem:[#allocation11 + $0x10] sm:$0xff]
    %v117 = vld [vmem:[#allocation11 + $0x18] sm:$0xff]
    %v118 = vld [vmem:[#allocation11 + $0x20] sm:$0xff]
    %v119 = vld [vmem:[#allocation11 + $0x28] sm:$0xff]
    %v120 = vld [vmem:[#allocation11 + $0x30] sm:$0xff]
    %v121 = vld [vmem:[#allocation11 + $0x38] sm:$0xff]
    %v122 = vld [vmem:[#allocation11 + $0x40] sm:$0xff]
    %v123 = vld [vmem:[#allocation11 + $0x48] sm:$0xff]
    %v124 = vld [vmem:[#allocation11 + $0x50] sm:$0xff]
    %v125 = vld [vmem:[#allocation11 + $0x58] sm:$0xff]
    %v126 = vld [vmem:[#allocation11 + $0x60] sm:$0xff]
    %v127 = vld [vmem:[#allocation11 + $0x68] sm:$0xff]
    %v128 = vld [vmem:[#allocation11 + $0x70] sm:$0xff]
    %v129 = vld [vmem:[#allocation11 + $0x78] sm:$0xff]
    %v130 = vld [vmem:[#allocation11 + $0x80] sm:$0xff]
    %v131 = vld [vmem:[#allocation11 + $0x88] sm:$0xff]
    %v132 = vld [vmem:[#allocation11 + $0x90] sm:$0xff]
    %v133 = vld [vmem:[#allocation11 + $0x98] sm:$0xff]
    %v134 = vld [vmem:[#allocation11 + $0xa0] sm:$0xff]
    %v135 = vld [vmem:[#allocation11 + $0xa8] sm:$0xff]
    %v136 = vld [vmem:[#allocation11 + $0xb0] sm:$0xff]
    %v137 = vld [vmem:[#allocation11 + $0xb8] sm:$0xff]
    %v138 = vld [vmem:[#allocation11 + $0xc0] sm:$0xff]
    %v139 = vld [vmem:[#allocation11 + $0xc8] sm:$0xff]
    %v140 = vld [vmem:[#allocation11 + $0xd0] sm:$0xff]
    %v141 = vld [vmem:[#allocation11 + $0xd8] sm:$0xff]
    %v142 = vld [vmem:[#allocation11 + $0xe0] sm:$0xff]
    %v143 = vld [vmem:[#allocation11 + $0xe8] sm:$0xff]
    %v144 = vld [vmem:[#allocation11 + $0xf0] sm:$0xff]
    %v145 = vld [vmem:[#allocation11 + $0xf8] sm:$0xff]
    %146 = vmatprep.subr.mxu0 %v145
    %147 = vmatpush1.msra.mxu0 %v144
    %148 = vmatprep.subr.mxu0 %v143
    %149 = vmatpush1.msra.mxu0 %v142
    %150 = vmatprep.subr.mxu0 %v141
    %151 = vmatpush1.msra.mxu0 %v140
    %152 = vmatprep.subr.mxu0 %v139
    %153 = vmatpush1.msra.mxu0 %v138
    %154 = vmatprep.subr.mxu0 %v137
    %155 = vmatpush1.msra.mxu0 %v136
    %156 = vmatprep.subr.mxu0 %v135
    %157 = vmatpush1.msra.mxu0 %v134
    %158 = vmatprep.subr.mxu0 %v133
    %159 = vmatpush1.msra.mxu0 %v132
    %160 = vmatprep.subr.mxu0 %v131
    %161 = vmatpush1.msra.mxu0 %v130
    %162 = vmatprep.subr.mxu0 %v129
    %163 = vmatpush1.msra.mxu0 %v128
    %164 = vmatprep.subr.mxu0 %v127
    %165 = vmatpush1.msra.mxu0 %v126
    %166 = vmatprep.subr.mxu0 %v125
    %167 = vmatpush1.msra.mxu0 %v124
    %168 = vmatprep.subr.mxu0 %v123
    %169 = vmatpush1.msra.mxu0 %v122
    %170 = vmatprep.subr.mxu0 %v121
    %171 = vmatpush1.msra.mxu0 %v120
    %172 = vmatprep.subr.mxu0 %v119
    %173 = vmatpush1.msra.mxu0 %v118
    %174 = vmatprep.subr.mxu0 %v117
    %175 = vmatpush1.msra.mxu0 %v116
    %176 = vmatprep.subr.mxu0 %v115
    %177 = vmatpush1.msra.mxu0 %v114
    %178 = vmatprep.subr.mxu0 0.0
    %179 = vmatpush2.msra.mxu0 0.0
    %180 = vmatprep.subr.mxu0 0.0
    %181 = vmatpush2.msra.mxu0 0.0
    %182 = vmatprep.subr.mxu0 0.0
    %183 = vmatpush2.msra.mxu0 0.0
    %184 = vmatprep.subr.mxu0 0.0
    %185 = vmatpush2.msra.mxu0 0.0
    %186 = vmatprep.subr.mxu0 0.0
    %187 = vmatpush2.msra.mxu0 0.0
    %188 = vmatprep.subr.mxu0 0.0
    %189 = vmatpush2.msra.mxu0 0.0
    %190 = vmatprep.subr.mxu0 0.0
    %191 = vmatpush2.msra.mxu0 0.0
    %192 = vmatprep.subr.mxu0 0.0
    %193 = vmatpush2.msra.mxu0 0.0
    %194 = vmatprep.subr.mxu0 0.0
    %195 = vmatpush2.msra.mxu0 0.0
    %196 = vmatprep.subr.mxu0 0.0
    %197 = vmatpush2.msra.mxu0 0.0
    %198 = vmatprep.subr.mxu0 0.0
    %199 = vmatpush2.msra.mxu0 0.0
    %200 = vmatprep.subr.mxu0 0.0
    %201 = vmatpush2.msra.mxu0 0.0
    %202 = vmatprep.subr.mxu0 0.0
    %203 = vmatpush2.msra.mxu0 0.0
    %204 = vmatprep.subr.mxu0 0.0
    %205 = vmatpush2.msra.mxu0 0.0
    %206 = vmatprep.subr.mxu0 0.0
    %207 = vmatpush2.msra.mxu0 0.0
    %208 = vmatprep.subr.mxu0 0.0
    %209 = vmatpush2.msra.mxu0 0.0
    %210 = vmatprep.mubr.f32.mxu0 0.0
    %211 = vmatmul.mubr.f32.gmra.mxu0 %v113
    %v212 = vpop.f32.mrf.mxu0
    %v213 = vadd.f32 0.0, %v212
    %v214 = vpop.f32.mrf.mxu0
    %v215 = vadd.f32 0.0, %v214
    %216 = vdwg.mxu0
    %v217 = vld [vmem:[#allocation3] sm:$0xff]
    %v218 = vadd.f32 %v217, %v213
    %v219 = vxor.u32 %v218, 2147483648
    %v220 = vmul.f32 %v219, 1.442695
    %v221 = vpow.pop %v220
    %v222 = vadd.f32 %v221, 1.0
    %v223 = vrcp.pop %v222
    %v224 = vmul.f32 1.0, %v223
    %v225 = vld [vmem:[#allocation6] sm:$0xff]
    %v226 = vadd.f32 %v225, %v215
    %v227 = vxor.u32 %v226, 2147483648
    %v228 = vmul.f32 %v227, 1.442695
    %v229 = vpow.pop %v228
    %v230 = vadd.f32 %v229, 1.0
    %v231 = vrcp.pop %v230
    %v232 = vmul.f32 1.0, %v231
    %v233 = vld [vmem:[#allocation8] sm:$0xff]
    %v234 = vmul.f32 %v232, %v113
    %v235 = vld [vmem:[#allocation12] sm:$0xff]
    %v236 = vld [vmem:[#allocation12 + $0x8] sm:$0xff]
    %v237 = vld [vmem:[#allocation12 + $0x10] sm:$0xff]
    %v238 = vld [vmem:[#allocation12 + $0x18] sm:$0xff]
    %v239 = vld [vmem:[#allocation12 + $0x20] sm:$0xff]
    %v240 = vld [vmem:[#allocation12 + $0x28] sm:$0xff]
    %v241 = vld [vmem:[#allocation12 + $0x30] sm:$0xff]
    %v242 = vld [vmem:[#allocation12 + $0x38] sm:$0xff]
    %v243 = vld [vmem:[#allocation12 + $0x40] sm:$0xff]
    %v244 = vld [vmem:[#allocation12 + $0x48] sm:$0xff]
    %v245 = vld [vmem:[#allocation12 + $0x50] sm:$0xff]
    %v246 = vld [vmem:[#allocation12 + $0x58] sm:$0xff]
    %v247 = vld [vmem:[#allocation12 + $0x60] sm:$0xff]
    %v248 = vld [vmem:[#allocation12 + $0x68] sm:$0xff]
    %v249 = vld [vmem:[#allocation12 + $0x70] sm:$0xff]
    %v250 = vld [vmem:[#allocation12 + $0x78] sm:$0xff]
    %251 = vmatprep.subr.mxu0 0.0
    %252 = vmatpush1.msra.mxu0 %v250
    %253 = vmatprep.subr.mxu0 0.0
    %254 = vmatpush1.msra.mxu0 %v249
    %255 = vmatprep.subr.mxu0 0.0
    %256 = vmatpush1.msra.mxu0 %v248
    %257 = vmatprep.subr.mxu0 0.0
    %258 = vmatpush1.msra.mxu0 %v247
    %259 = vmatprep.subr.mxu0 0.0
    %260 = vmatpush1.msra.mxu0 %v246
    %261 = vmatprep.subr.mxu0 0.0
    %262 = vmatpush1.msra.mxu0 %v245
    %263 = vmatprep.subr.mxu0 0.0
    %264 = vmatpush1.msra.mxu0 %v244
    %265 = vmatprep.subr.mxu0 0.0
    %266 = vmatpush1.msra.mxu0 %v243
    %267 = vmatprep.subr.mxu0 0.0
    %268 = vmatpush1.msra.mxu0 %v242
    %269 = vmatprep.subr.mxu0 0.0
    %270 = vmatpush1.msra.mxu0 %v241
    %271 = vmatprep.subr.mxu0 0.0
    %272 = vmatpush1.msra.mxu0 %v240
    %273 = vmatprep.subr.mxu0 0.0
    %274 = vmatpush1.msra.mxu0 %v239
    %275 = vmatprep.subr.mxu0 0.0
    %276 = vmatpush1.msra.mxu0 %v238
    %277 = vmatprep.subr.mxu0 0.0
    %278 = vmatpush1.msra.mxu0 %v237
    %279 = vmatprep.subr.mxu0 0.0
    %280 = vmatpush1.msra.mxu0 %v236
    %281 = vmatprep.subr.mxu0 0.0
    %282 = vmatpush1.msra.mxu0 %v235
    %283 = vmatprep.subr.mxu0 0.0
    %284 = vmatpush2.msra.mxu0 0.0
    %285 = vmatprep.subr.mxu0 0.0
    %286 = vmatpush2.msra.mxu0 0.0
    %287 = vmatprep.subr.mxu0 0.0
    %288 = vmatpush2.msra.mxu0 0.0
    %289 = vmatprep.subr.mxu0 0.0
    %290 = vmatpush2.msra.mxu0 0.0
    %291 = vmatprep.subr.mxu0 0.0
    %292 = vmatpush2.msra.mxu0 0.0
    %293 = vmatprep.subr.mxu0 0.0
    %294 = vmatpush2.msra.mxu0 0.0
    %295 = vmatprep.subr.mxu0 0.0
    %296 = vmatpush2.msra.mxu0 0.0
    %297 = vmatprep.subr.mxu0 0.0
    %298 = vmatpush2.msra.mxu0 0.0
    %299 = vmatprep.subr.mxu0 0.0
    %300 = vmatpush2.msra.mxu0 0.0
    %301 = vmatprep.subr.mxu0 0.0
    %302 = vmatpush2.msra.mxu0 0.0
    %303 = vmatprep.subr.mxu0 0.0
    %304 = vmatpush2.msra.mxu0 0.0
    %305 = vmatprep.subr.mxu0 0.0
    %306 = vmatpush2.msra.mxu0 0.0
    %307 = vmatprep.subr.mxu0 0.0
    %308 = vmatpush2.msra.mxu0 0.0
    %309 = vmatprep.subr.mxu0 0.0
    %310 = vmatpush2.msra.mxu0 0.0
    %311 = vmatprep.subr.mxu0 0.0
    %312 = vmatpush2.msra.mxu0 0.0
    %313 = vmatprep.subr.mxu0 0.0
    %314 = vmatpush2.msra.mxu0 0.0
    %315 = vmatprep.mubr.f32.mxu0 0.0
    %316 = vmatmul.mubr.f32.gmra.mxu0 %v234
    %v317 = vpop.f32.mrf.mxu0
    %v318 = vadd.f32 0.0, %v317
    %v319 = vpop.f32.mrf.mxu0
    %320 = vdwg.mxu0
    %v321 = vadd.f32 %v233, %v318
    %v322 = vtanh.pop %v321
    %v323 = vsub.f32 1.0, %v224
    %v324 = vmul.f32 %v323, %v113
    %v325 = vmul.f32 %v224, %v322
    %v326 = vadd.f32 %v324, %v325
    %327 = vst [vmem:[#allocation14] sm:$0xff] %v326
    %s328 = scalar_lea.vmem [#allocation9], 8
    %v329 = vld [vmem:[%s328] sm:$0xff]
    %v330 = vmul.f32 %v329, %v326
    %v331 = vld [vmem:[#allocation11] sm:$0xff]
    %v332 = vld [vmem:[#allocation11 + $0x8] sm:$0xff]
    %v333 = vld [vmem:[#allocation11 + $0x10] sm:$0xff]
    %v334 = vld [vmem:[#allocation11 + $0x18] sm:$0xff]
    %v335 = vld [vmem:[#allocation11 + $0x20] sm:$0xff]
    %v336 = vld [vmem:[#allocation11 + $0x28] sm:$0xff]
    %v337 = vld [vmem:[#allocation11 + $0x30] sm:$0xff]
    %v338 = vld [vmem:[#allocation11 + $0x38] sm:$0xff]
    %v339 = vld [vmem:[#allocation11 + $0x40] sm:$0xff]
    %v340 = vld [vmem:[#allocation11 + $0x48] sm:$0xff]
    %v341 = vld [vmem:[#allocation11 + $0x50] sm:$0xff]
    %v342 = vld [vmem:[#allocation11 + $0x58] sm:$0xff]
    %v343 = vld [vmem:[#allocation11 + $0x60] sm:$0xff]
    %v344 = vld [vmem:[#allocation11 + $0x68] sm:$0xff]
    %v345 = vld [vmem:[#allocation11 + $0x70] sm:$0xff]
    %v346 = vld [vmem:[#allocation11 + $0x78] sm:$0xff]
    %v347 = vld [vmem:[#allocation11 + $0x80] sm:$0xff]
    %v348 = vld [vmem:[#allocation11 + $0x88] sm:$0xff]
    %v349 = vld [vmem:[#allocation11 + $0x90] sm:$0xff]
    %v350 = vld [vmem:[#allocation11 + $0x98] sm:$0xff]
    %v351 = vld [vmem:[#allocation11 + $0xa0] sm:$0xff]
    %v352 = vld [vmem:[#allocation11 + $0xa8] sm:$0xff]
    %v353 = vld [vmem:[#allocation11 + $0xb0] sm:$0xff]
    %v354 = vld [vmem:[#allocation11 + $0xb8] sm:$0xff]
    %v355 = vld [vmem:[#allocation11 + $0xc0] sm:$0xff]
    %v356 = vld [vmem:[#allocation11 + $0xc8] sm:$0xff]
    %v357 = vld [vmem:[#allocation11 + $0xd0] sm:$0xff]
    %v358 = vld [vmem:[#allocation11 + $0xd8] sm:$0xff]
    %v359 = vld [vmem:[#allocation11 + $0xe0] sm:$0xff]
    %v360 = vld [vmem:[#allocation11 + $0xe8] sm:$0xff]
    %v361 = vld [vmem:[#allocation11 + $0xf0] sm:$0xff]
    %v362 = vld [vmem:[#allocation11 + $0xf8] sm:$0xff]
    %363 = vmatprep.subr.mxu0 %v362
    %364 = vmatpush1.msra.mxu0 %v361
    %365 = vmatprep.subr.mxu0 %v360
    %366 = vmatpush1.msra.mxu0 %v359
    %367 = vmatprep.subr.mxu0 %v358
    %368 = vmatpush1.msra.mxu0 %v357
    %369 = vmatprep.subr.mxu0 %v356
    %370 = vmatpush1.msra.mxu0 %v355
    %371 = vmatprep.subr.mxu0 %v354
    %372 = vmatpush1.msra.mxu0 %v353
    %373 = vmatprep.subr.mxu0 %v352
    %374 = vmatpush1.msra.mxu0 %v351
    %375 = vmatprep.subr.mxu0 %v350
    %376 = vmatpush1.msra.mxu0 %v349
    %377 = vmatprep.subr.mxu0 %v348
    %378 = vmatpush1.msra.mxu0 %v347
    %379 = vmatprep.subr.mxu0 %v346
    %380 = vmatpush1.msra.mxu0 %v345
    %381 = vmatprep.subr.mxu0 %v344
    %382 = vmatpush1.msra.mxu0 %v343
    %383 = vmatprep.subr.mxu0 %v342
    %384 = vmatpush1.msra.mxu0 %v341
    %385 = vmatprep.subr.mxu0 %v340
    %386 = vmatpush1.msra.mxu0 %v339
    %387 = vmatprep.subr.mxu0 %v338
    %388 = vmatpush1.msra.mxu0 %v337
    %389 = vmatprep.subr.mxu0 %v336
    %390 = vmatpush1.msra.mxu0 %v335
    %391 = vmatprep.subr.mxu0 %v334
    %392 = vmatpush1.msra.mxu0 %v333
    %393 = vmatprep.subr.mxu0 %v332
    %394 = vmatpush1.msra.mxu0 %v331
    %395 = vmatprep.subr.mxu0 0.0
    %396 = vmatpush2.msra.mxu0 0.0
    %397 = vmatprep.subr.mxu0 0.0
    %398 = vmatpush2.msra.mxu0 0.0
    %399 = vmatprep.subr.mxu0 0.0
    %400 = vmatpush2.msra.mxu0 0.0
    %401 = vmatprep.subr.mxu0 0.0
    %402 = vmatpush2.msra.mxu0 0.0
    %403 = vmatprep.subr.mxu0 0.0
    %404 = vmatpush2.msra.mxu0 0.0
    %405 = vmatprep.subr.mxu0 0.0
    %406 = vmatpush2.msra.mxu0 0.0
    %407 = vmatprep.subr.mxu0 0.0
    %408 = vmatpush2.msra.mxu0 0.0
    %409 = vmatprep.subr.mxu0 0.0
    %410 = vmatpush2.msra.mxu0 0.0
    %411 = vmatprep.subr.mxu0 0.0
    %412 = vmatpush2.msra.mxu0 0.0
    %413 = vmatprep.subr.mxu0 0.0
    %414 = vmatpush2.msra.mxu0 0.0
    %415 = vmatprep.subr.mxu0 0.0
    %416 = vmatpush2.msra.mxu0 0.0
    %417 = vmatprep.subr.mxu0 0.0
    %418 = vmatpush2.msra.mxu0 0.0
    %419 = vmatprep.subr.mxu0 0.0
    %420 = vmatpush2.msra.mxu0 0.0
    %421 = vmatprep.subr.mxu0 0.0
    %422 = vmatpush2.msra.mxu0 0.0
    %423 = vmatprep.subr.mxu0 0.0
    %424 = vmatpush2.msra.mxu0 0.0
    %425 = vmatprep.subr.mxu0 0.0
    %426 = vmatpush2.msra.mxu0 0.0
    %427 = vmatprep.mubr.f32.mxu0 0.0
    %428 = vmatmul.mubr.f32.gmra.mxu0 %v330
    %v429 = vpop.f32.mrf.mxu0
    %v430 = vadd.f32 0.0, %v429
    %v431 = vpop.f32.mrf.mxu0
    %v432 = vadd.f32 0.0, %v431
    %433 = vdwg.mxu0
    %s434 = scalar_lea.vmem [#allocation3], 8
    %v435 = vld [vmem:[%s434] sm:$0xff]
    %v436 = vadd.f32 %v435, %v430
    %v437 = vxor.u32 %v436, 2147483648
    %v438 = vmul.f32 %v437, 1.442695
    %v439 = vpow.pop %v438
    %v440 = vadd.f32 %v439, 1.0
    %v441 = vrcp.pop %v440
    %v442 = vmul.f32 1.0, %v441
    %s443 = scalar_lea.vmem [#allocation6], 8
    %v444 = vld [vmem:[%s443] sm:$0xff]
    %v445 = vadd.f32 %v444, %v432
    %v446 = vxor.u32 %v445, 2147483648
    %v447 = vmul.f32 %v446, 1.442695
    %v448 = vpow.pop %v447
    %v449 = vadd.f32 %v448, 1.0
    %v450 = vrcp.pop %v449
    %v451 = vmul.f32 1.0, %v450
    %s452 = scalar_lea.vmem [#allocation8], 8
    %v453 = vld [vmem:[%s452] sm:$0xff]
    %v454 = vmul.f32 %v451, %v330
    %v455 = vld [vmem:[#allocation12] sm:$0xff]
    %v456 = vld [vmem:[#allocation12 + $0x8] sm:$0xff]
    %v457 = vld [vmem:[#allocation12 + $0x10] sm:$0xff]
    %v458 = vld [vmem:[#allocation12 + $0x18] sm:$0xff]
    %v459 = vld [vmem:[#allocation12 + $0x20] sm:$0xff]
    %v460 = vld [vmem:[#allocation12 + $0x28] sm:$0xff]
    %v461 = vld [vmem:[#allocation12 + $0x30] sm:$0xff]
    %v462 = vld [vmem:[#allocation12 + $0x38] sm:$0xff]
    %v463 = vld [vmem:[#allocation12 + $0x40] sm:$0xff]
    %v464 = vld [vmem:[#allocation12 + $0x48] sm:$0xff]
    %v465 = vld [vmem:[#allocation12 + $0x50] sm:$0xff]
    %v466 = vld [vmem:[#allocation12 + $0x58] sm:$0xff]
    %v467 = vld [vmem:[#allocation12 + $0x60] sm:$0xff]
    %v468 = vld [vmem:[#allocation12 + $0x68] sm:$0xff]
    %v469 = vld [vmem:[#allocation12 + $0x70] sm:$0xff]
    %v470 = vld [vmem:[#allocation12 + $0x78] sm:$0xff]
    %471 = vmatprep.subr.mxu0 0.0
    %472 = vmatpush1.msra.mxu0 %v470
    %473 = vmatprep.subr.mxu0 0.0
    %474 = vmatpush1.msra.mxu0 %v469
    %475 = vmatprep.subr.mxu0 0.0
    %476 = vmatpush1.msra.mxu0 %v468
    %477 = vmatprep.subr.mxu0 0.0
    %478 = vmatpush1.msra.mxu0 %v467
    %479 = vmatprep.subr.mxu0 0.0
    %480 = vmatpush1.msra.mxu0 %v466
    %481 = vmatprep.subr.mxu0 0.0
    %482 = vmatpush1.msra.mxu0 %v465
    %483 = vmatprep.subr.mxu0 0.0
    %484 = vmatpush1.msra.mxu0 %v464
    %485 = vmatprep.subr.mxu0 0.0
    %486 = vmatpush1.msra.mxu0 %v463
    %487 = vmatprep.subr.mxu0 0.0
    %488 = vmatpush1.msra.mxu0 %v462
    %489 = vmatprep.subr.mxu0 0.0
    %490 = vmatpush1.msra.mxu0 %v461
    %491 = vmatprep.subr.mxu0 0.0
    %492 = vmatpush1.msra.mxu0 %v460
    %493 = vmatprep.subr.mxu0 0.0
    %494 = vmatpush1.msra.mxu0 %v459
    %495 = vmatprep.subr.mxu0 0.0
    %496 = vmatpush1.msra.mxu0 %v458
    %497 = vmatprep.subr.mxu0 0.0
    %498 = vmatpush1.msra.mxu0 %v457
    %499 = vmatprep.subr.mxu0 0.0
    %500 = vmatpush1.msra.mxu0 %v456
    %501 = vmatprep.subr.mxu0 0.0
    %502 = vmatpush1.msra.mxu0 %v455
    %503 = vmatprep.subr.mxu0 0.0
    %504 = vmatpush2.msra.mxu0 0.0
    %505 = vmatprep.subr.mxu0 0.0
    %506 = vmatpush2.msra.mxu0 0.0
    %507 = vmatprep.subr.mxu0 0.0
    %508 = vmatpush2.msra.mxu0 0.0
    %509 = vmatprep.subr.mxu0 0.0
    %510 = vmatpush2.msra.mxu0 0.0
    %511 = vmatprep.subr.mxu0 0.0
    %512 = vmatpush2.msra.mxu0 0.0
    %513 = vmatprep.subr.mxu0 0.0
    %514 = vmatpush2.msra.mxu0 0.0
    %515 = vmatprep.subr.mxu0 0.0
    %516 = vmatpush2.msra.mxu0 0.0
    %517 = vmatprep.subr.mxu0 0.0
    %518 = vmatpush2.msra.mxu0 0.0
    %519 = vmatprep.subr.mxu0 0.0
    %520 = vmatpush2.msra.mxu0 0.0
    %521 = vmatprep.subr.mxu0 0.0
    %522 = vmatpush2.msra.mxu0 0.0
    %523 = vmatprep.subr.mxu0 0.0
    %524 = vmatpush2.msra.mxu0 0.0
    %525 = vmatprep.subr.mxu0 0.0
    %526 = vmatpush2.msra.mxu0 0.0
    %527 = vmatprep.subr.mxu0 0.0
    %528 = vmatpush2.msra.mxu0 0.0
    %529 = vmatprep.subr.mxu0 0.0
    %530 = vmatpush2.msra.mxu0 0.0
    %531 = vmatprep.subr.mxu0 0.0
    %532 = vmatpush2.msra.mxu0 0.0
    %533 = vmatprep.subr.mxu0 0.0
    %534 = vmatpush2.msra.mxu0 0.0
    %535 = vmatprep.mubr.f32.mxu0 0.0
    %536 = vmatmul.mubr.f32.gmra.mxu0 %v454
    %v537 = vpop.f32.mrf.mxu0
    %v538 = vadd.f32 0.0, %v537
    %v539 = vpop.f32.mrf.mxu0
    %540 = vdwg.mxu0
    %v541 = vadd.f32 %v453, %v538
    %v542 = vtanh.pop %v541
    %v543 = vsub.f32 1.0, %v442
    %v544 = vmul.f32 %v543, %v330
    %v545 = vmul.f32 %v442, %v542
    %v546 = vadd.f32 %v544, %v545
    %s547 = scalar_lea.vmem [#allocation14], 8
    %548 = vst [vmem:[%s547] sm:$0xff] %v546
    %s549 = scalar_lea.vmem [#allocation9], 16
    %v550 = vld [vmem:[%s549] sm:$0xff]
    %v551 = vmul.f32 %v550, %v546
    %v552 = vld [vmem:[#allocation11] sm:$0xff]
    %v553 = vld [vmem:[#allocation11 + $0x8] sm:$0xff]
    %v554 = vld [vmem:[#allocation11 + $0x10] sm:$0xff]
    %v555 = vld [vmem:[#allocation11 + $0x18] sm:$0xff]
    %v556 = vld [vmem:[#allocation11 + $0x20] sm:$0xff]
    %v557 = vld [vmem:[#allocation11 + $0x28] sm:$0xff]
    %v558 = vld [vmem:[#allocation11 + $0x30] sm:$0xff]
    %v559 = vld [vmem:[#allocation11 + $0x38] sm:$0xff]
    %v560 = vld [vmem:[#allocation11 + $0x40] sm:$0xff]
    %v561 = vld [vmem:[#allocation11 + $0x48] sm:$0xff]
    %v562 = vld [vmem:[#allocation11 + $0x50] sm:$0xff]
    %v563 = vld [vmem:[#allocation11 + $0x58] sm:$0xff]
    %v564 = vld [vmem:[#allocation11 + $0x60] sm:$0xff]
    %v565 = vld [vmem:[#allocation11 + $0x68] sm:$0xff]
    %v566 = vld [vmem:[#allocation11 + $0x70] sm:$0xff]
    %v567 = vld [vmem:[#allocation11 + $0x78] sm:$0xff]
    %v568 = vld [vmem:[#allocation11 + $0x80] sm:$0xff]
    %v569 = vld [vmem:[#allocation11 + $0x88] sm:$0xff]
    %v570 = vld [vmem:[#allocation11 + $0x90] sm:$0xff]
    %v571 = vld [vmem:[#allocation11 + $0x98] sm:$0xff]
    %v572 = vld [vmem:[#allocation11 + $0xa0] sm:$0xff]
    %v573 = vld [vmem:[#allocation11 + $0xa8] sm:$0xff]
    %v574 = vld [vmem:[#allocation11 + $0xb0] sm:$0xff]
    %v575 = vld [vmem:[#allocation11 + $0xb8] sm:$0xff]
    %v576 = vld [vmem:[#allocation11 + $0xc0] sm:$0xff]
    %v577 = vld [vmem:[#allocation11 + $0xc8] sm:$0xff]
    %v578 = vld [vmem:[#allocation11 + $0xd0] sm:$0xff]
    %v579 = vld [vmem:[#allocation11 + $0xd8] sm:$0xff]
    %v580 = vld [vmem:[#allocation11 + $0xe0] sm:$0xff]
    %v581 = vld [vmem:[#allocation11 + $0xe8] sm:$0xff]
    %v582 = vld [vmem:[#allocation11 + $0xf0] sm:$0xff]
    %v583 = vld [vmem:[#allocation11 + $0xf8] sm:$0xff]
    %584 = vmatprep.subr.mxu0 %v583
    %585 = vmatpush1.msra.mxu0 %v582
    %586 = vmatprep.subr.mxu0 %v581
    %587 = vmatpush1.msra.mxu0 %v580
    %588 = vmatprep.subr.mxu0 %v579
    %589 = vmatpush1.msra.mxu0 %v578
    %590 = vmatprep.subr.mxu0 %v577
    %591 = vmatpush1.msra.mxu0 %v576
    %592 = vmatprep.subr.mxu0 %v575
    %593 = vmatpush1.msra.mxu0 %v574
    %594 = vmatprep.subr.mxu0 %v573
    %595 = vmatpush1.msra.mxu0 %v572
    %596 = vmatprep.subr.mxu0 %v571
    %597 = vmatpush1.msra.mxu0 %v570
    %598 = vmatprep.subr.mxu0 %v569
    %599 = vmatpush1.msra.mxu0 %v568
    %600 = vmatprep.subr.mxu0 %v567
    %601 = vmatpush1.msra.mxu0 %v566
    %602 = vmatprep.subr.mxu0 %v565
    %603 = vmatpush1.msra.mxu0 %v564
    %604 = vmatprep.subr.mxu0 %v563
    %605 = vmatpush1.msra.mxu0 %v562
    %606 = vmatprep.subr.mxu0 %v561
    %607 = vmatpush1.msra.mxu0 %v560
    %608 = vmatprep.subr.mxu0 %v559
    %609 = vmatpush1.msra.mxu0 %v558
    %610 = vmatprep.subr.mxu0 %v557
    %611 = vmatpush1.msra.mxu0 %v556
    %612 = vmatprep.subr.mxu0 %v555
    %613 = vmatpush1.msra.mxu0 %v554
    %614 = vmatprep.subr.mxu0 %v553
    %615 = vmatpush1.msra.mxu0 %v552
    %616 = vmatprep.subr.mxu0 0.0
    %617 = vmatpush2.msra.mxu0 0.0
    %618 = vmatprep.subr.mxu0 0.0
    %619 = vmatpush2.msra.mxu0 0.0
    %620 = vmatprep.subr.mxu0 0.0
    %621 = vmatpush2.msra.mxu0 0.0
    %622 = vmatprep.subr.mxu0 0.0
    %623 = vmatpush2.msra.mxu0 0.0
    %624 = vmatprep.subr.mxu0 0.0
    %625 = vmatpush2.msra.mxu0 0.0
    %626 = vmatprep.subr.mxu0 0.0
    %627 = vmatpush2.msra.mxu0 0.0
    %628 = vmatprep.subr.mxu0 0.0
    %629 = vmatpush2.msra.mxu0 0.0
    %630 = vmatprep.subr.mxu0 0.0
    %631 = vmatpush2.msra.mxu0 0.0
    %632 = vmatprep.subr.mxu0 0.0
    %633 = vmatpush2.msra.mxu0 0.0
    %634 = vmatprep.subr.mxu0 0.0
    %635 = vmatpush2.msra.mxu0 0.0
    %636 = vmatprep.subr.mxu0 0.0
    %637 = vmatpush2.msra.mxu0 0.0
    %638 = vmatprep.subr.mxu0 0.0
    %639 = vmatpush2.msra.mxu0 0.0
    %640 = vmatprep.subr.mxu0 0.0
    %641 = vmatpush2.msra.mxu0 0.0
    %642 = vmatprep.subr.mxu0 0.0
    %643 = vmatpush2.msra.mxu0 0.0
    %644 = vmatprep.subr.mxu0 0.0
    %645 = vmatpush2.msra.mxu0 0.0
    %646 = vmatprep.subr.mxu0 0.0
    %647 = vmatpush2.msra.mxu0 0.0
    %648 = vmatprep.mubr.f32.mxu0 0.0
    %649 = vmatmul.mubr.f32.gmra.mxu0 %v551
    %v650 = vpop.f32.mrf.mxu0
    %v651 = vadd.f32 0.0, %v650
    %v652 = vpop.f32.mrf.mxu0
    %v653 = vadd.f32 0.0, %v652
    %654 = vdwg.mxu0
    %s655 = scalar_lea.vmem [#allocation3], 16
    %v656 = vld [vmem:[%s655] sm:$0xff]
    %v657 = vadd.f32 %v656, %v651
    %v658 = vxor.u32 %v657, 2147483648
    %v659 = vmul.f32 %v658, 1.442695
    %v660 = vpow.pop %v659
    %v661 = vadd.f32 %v660, 1.0
    %v662 = vrcp.pop %v661
    %v663 = vmul.f32 1.0, %v662
    %s664 = scalar_lea.vmem [#allocation6], 16
    %v665 = vld [vmem:[%s664] sm:$0xff]
    %v666 = vadd.f32 %v665, %v653
    %v667 = vxor.u32 %v666, 2147483648
    %v668 = vmul.f32 %v667, 1.442695
    %v669 = vpow.pop %v668
    %v670 = vadd.f32 %v669, 1.0
    %v671 = vrcp.pop %v670
    %v672 = vmul.f32 1.0, %v671
    %s673 = scalar_lea.vmem [#allocation8], 16
    %v674 = vld [vmem:[%s673] sm:$0xff]
    %v675 = vmul.f32 %v672, %v551
    %v676 = vld [vmem:[#allocation12] sm:$0xff]
    %v677 = vld [vmem:[#allocation12 + $0x8] sm:$0xff]
    %v678 = vld [vmem:[#allocation12 + $0x10] sm:$0xff]
    %v679 = vld [vmem:[#allocation12 + $0x18] sm:$0xff]
    %v680 = vld [vmem:[#allocation12 + $0x20] sm:$0xff]
    %v681 = vld [vmem:[#allocation12 + $0x28] sm:$0xff]
    %v682 = vld [vmem:[#allocation12 + $0x30] sm:$0xff]
    %v683 = vld [vmem:[#allocation12 + $0x38] sm:$0xff]
    %v684 = vld [vmem:[#allocation12 + $0x40] sm:$0xff]
    %v685 = vld [vmem:[#allocation12 + $0x48] sm:$0xff]
    %v686 = vld [vmem:[#allocation12 + $0x50] sm:$0xff]
    %v687 = vld [vmem:[#allocation12 + $0x58] sm:$0xff]
    %v688 = vld [vmem:[#allocation12 + $0x60] sm:$0xff]
    %v689 = vld [vmem:[#allocation12 + $0x68] sm:$0xff]
    %v690 = vld [vmem:[#allocation12 + $0x70] sm:$0xff]
    %v691 = vld [vmem:[#allocation12 + $0x78] sm:$0xff]
    %692 = vmatprep.subr.mxu0 0.0
    %693 = vmatpush1.msra.mxu0 %v691
    %694 = vmatprep.subr.mxu0 0.0
    %695 = vmatpush1.msra.mxu0 %v690
    %696 = vmatprep.subr.mxu0 0.0
    %697 = vmatpush1.msra.mxu0 %v689
    %698 = vmatprep.subr.mxu0 0.0
    %699 = vmatpush1.msra.mxu0 %v688
    %700 = vmatprep.subr.mxu0 0.0
    %701 = vmatpush1.msra.mxu0 %v687
    %702 = vmatprep.subr.mxu0 0.0
    %703 = vmatpush1.msra.mxu0 %v686
    %704 = vmatprep.subr.mxu0 0.0
    %705 = vmatpush1.msra.mxu0 %v685
    %706 = vmatprep.subr.mxu0 0.0
    %707 = vmatpush1.msra.mxu0 %v684
    %708 = vmatprep.subr.mxu0 0.0
    %709 = vmatpush1.msra.mxu0 %v683
    %710 = vmatprep.subr.mxu0 0.0
    %711 = vmatpush1.msra.mxu0 %v682
    %712 = vmatprep.subr.mxu0 0.0
    %713 = vmatpush1.msra.mxu0 %v681
    %714 = vmatprep.subr.mxu0 0.0
    %715 = vmatpush1.msra.mxu0 %v680
    %716 = vmatprep.subr.mxu0 0.0
    %717 = vmatpush1.msra.mxu0 %v679
    %718 = vmatprep.subr.mxu0 0.0
    %719 = vmatpush1.msra.mxu0 %v678
    %720 = vmatprep.subr.mxu0 0.0
    %721 = vmatpush1.msra.mxu0 %v677
    %722 = vmatprep.subr.mxu0 0.0
    %723 = vmatpush1.msra.mxu0 %v676
    %724 = vmatprep.subr.mxu0 0.0
    %725 = vmatpush2.msra.mxu0 0.0
    %726 = vmatprep.subr.mxu0 0.0
    %727 = vmatpush2.msra.mxu0 0.0
    %728 = vmatprep.subr.mxu0 0.0
    %729 = vmatpush2.msra.mxu0 0.0
    %730 = vmatprep.subr.mxu0 0.0
    %731 = vmatpush2.msra.mxu0 0.0
    %732 = vmatprep.subr.mxu0 0.0
    %733 = vmatpush2.msra.mxu0 0.0
    %734 = vmatprep.subr.mxu0 0.0
    %735 = vmatpush2.msra.mxu0 0.0
    %736 = vmatprep.subr.mxu0 0.0
    %737 = vmatpush2.msra.mxu0 0.0
    %738 = vmatprep.subr.mxu0 0.0
    %739 = vmatpush2.msra.mxu0 0.0
    %740 = vmatprep.subr.mxu0 0.0
    %741 = vmatpush2.msra.mxu0 0.0
    %742 = vmatprep.subr.mxu0 0.0
    %743 = vmatpush2.msra.mxu0 0.0
    %744 = vmatprep.subr.mxu0 0.0
    %745 = vmatpush2.msra.mxu0 0.0
    %746 = vmatprep.subr.mxu0 0.0
    %747 = vmatpush2.msra.mxu0 0.0
    %748 = vmatprep.subr.mxu0 0.0
    %749 = vmatpush2.msra.mxu0 0.0
    %750 = vmatprep.subr.mxu0 0.0
    %751 = vmatpush2.msra.mxu0 0.0
    %752 = vmatprep.subr.mxu0 0.0
    %753 = vmatpush2.msra.mxu0 0.0
    %754 = vmatprep.subr.mxu0 0.0
    %755 = vmatpush2.msra.mxu0 0.0
    %756 = vmatprep.mubr.f32.mxu0 0.0
    %757 = vmatmul.mubr.f32.gmra.mxu0 %v675
    %v758 = vpop.f32.mrf.mxu0
    %v759 = vadd.f32 0.0, %v758
    %v760 = vpop.f32.mrf.mxu0
    %761 = vdwg.mxu0
    %v762 = vadd.f32 %v674, %v759
    %v763 = vtanh.pop %v762
    %v764 = vsub.f32 1.0, %v663
    %v765 = vmul.f32 %v764, %v551
    %v766 = vmul.f32 %v663, %v763
    %v767 = vadd.f32 %v765, %v766
    %s768 = scalar_lea.vmem [#allocation14], 16
    %769 = vst [vmem:[%s768] sm:$0xff] %v767
    %s770 = scalar_lea.vmem [#allocation9], 24
    %v771 = vld [vmem:[%s770] sm:$0xff]
    %v772 = vmul.f32 %v771, %v767
    %v773 = vld [vmem:[#allocation11] sm:$0xff]
    %v774 = vld [vmem:[#allocation11 + $0x8] sm:$0xff]
    %v775 = vld [vmem:[#allocation11 + $0x10] sm:$0xff]
    %v776 = vld [vmem:[#allocation11 + $0x18] sm:$0xff]
    %v777 = vld [vmem:[#allocation11 + $0x20] sm:$0xff]
    %v778 = vld [vmem:[#allocation11 + $0x28] sm:$0xff]
    %v779 = vld [vmem:[#allocation11 + $0x30] sm:$0xff]
    %v780 = vld [vmem:[#allocation11 + $0x38] sm:$0xff]
    %v781 = vld [vmem:[#allocation11 + $0x40] sm:$0xff]
    %v782 = vld [vmem:[#allocation11 + $0x48] sm:$0xff]
    %v783 = vld [vmem:[#allocation11 + $0x50] sm:$0xff]
    %v784 = vld [vmem:[#allocation11 + $0x58] sm:$0xff]
    %v785 = vld [vmem:[#allocation11 + $0x60] sm:$0xff]
    %v786 = vld [vmem:[#allocation11 + $0x68] sm:$0xff]
    %v787 = vld [vmem:[#allocation11 + $0x70] sm:$0xff]
    %v788 = vld [vmem:[#allocation11 + $0x78] sm:$0xff]
    %v789 = vld [vmem:[#allocation11 + $0x80] sm:$0xff]
    %v790 = vld [vmem:[#allocation11 + $0x88] sm:$0xff]
    %v791 = vld [vmem:[#allocation11 + $0x90] sm:$0xff]
    %v792 = vld [vmem:[#allocation11 + $0x98] sm:$0xff]
    %v793 = vld [vmem:[#allocation11 + $0xa0] sm:$0xff]
    %v794 = vld [vmem:[#allocation11 + $0xa8] sm:$0xff]
    %v795 = vld [vmem:[#allocation11 + $0xb0] sm:$0xff]
    %v796 = vld [vmem:[#allocation11 + $0xb8] sm:$0xff]
    %v797 = vld [vmem:[#allocation11 + $0xc0] sm:$0xff]
    %v798 = vld [vmem:[#allocation11 + $0xc8] sm:$0xff]
    %v799 = vld [vmem:[#allocation11 + $0xd0] sm:$0xff]
    %v800 = vld [vmem:[#allocation11 + $0xd8] sm:$0xff]
    %v801 = vld [vmem:[#allocation11 + $0xe0] sm:$0xff]
    %v802 = vld [vmem:[#allocation11 + $0xe8] sm:$0xff]
    %v803 = vld [vmem:[#allocation11 + $0xf0] sm:$0xff]
    %v804 = vld [vmem:[#allocation11 + $0xf8] sm:$0xff]
    %805 = vmatprep.subr.mxu0 %v804
    %806 = vmatpush1.msra.mxu0 %v803
    %807 = vmatprep.subr.mxu0 %v802
    %808 = vmatpush1.msra.mxu0 %v801
    %809 = vmatprep.subr.mxu0 %v800
    %810 = vmatpush1.msra.mxu0 %v799
    %811 = vmatprep.subr.mxu0 %v798
    %812 = vmatpush1.msra.mxu0 %v797
    %813 = vmatprep.subr.mxu0 %v796
    %814 = vmatpush1.msra.mxu0 %v795
    %815 = vmatprep.subr.mxu0 %v794
    %816 = vmatpush1.msra.mxu0 %v793
    %817 = vmatprep.subr.mxu0 %v792
    %818 = vmatpush1.msra.mxu0 %v791
    %819 = vmatprep.subr.mxu0 %v790
    %820 = vmatpush1.msra.mxu0 %v789
    %821 = vmatprep.subr.mxu0 %v788
    %822 = vmatpush1.msra.mxu0 %v787
    %823 = vmatprep.subr.mxu0 %v786
    %824 = vmatpush1.msra.mxu0 %v785
    %825 = vmatprep.subr.mxu0 %v784
    %826 = vmatpush1.msra.mxu0 %v783
    %827 = vmatprep.subr.mxu0 %v782
    %828 = vmatpush1.msra.mxu0 %v781
    %829 = vmatprep.subr.mxu0 %v780
    %830 = vmatpush1.msra.mxu0 %v779
    %831 = vmatprep.subr.mxu0 %v778
    %832 = vmatpush1.msra.mxu0 %v777
    %833 = vmatprep.subr.mxu0 %v776
    %834 = vmatpush1.msra.mxu0 %v775
    %835 = vmatprep.subr.mxu0 %v774
    %836 = vmatpush1.msra.mxu0 %v773
    %837 = vmatprep.subr.mxu0 0.0
    %838 = vmatpush2.msra.mxu0 0.0
    %839 = vmatprep.subr.mxu0 0.0
    %840 = vmatpush2.msra.mxu0 0.0
    %841 = vmatprep.subr.mxu0 0.0
    %842 = vmatpush2.msra.mxu0 0.0
    %843 = vmatprep.subr.mxu0 0.0
    %844 = vmatpush2.msra.mxu0 0.0
    %845 = vmatprep.subr.mxu0 0.0
    %846 = vmatpush2.msra.mxu0 0.0
    %847 = vmatprep.subr.mxu0 0.0
    %848 = vmatpush2.msra.mxu0 0.0
    %849 = vmatprep.subr.mxu0 0.0
    %850 = vmatpush2.msra.mxu0 0.0
    %851 = vmatprep.subr.mxu0 0.0
    %852 = vmatpush2.msra.mxu0 0.0
    %853 = vmatprep.subr.mxu0 0.0
    %854 = vmatpush2.msra.mxu0 0.0
    %855 = vmatprep.subr.mxu0 0.0
    %856 = vmatpush2.msra.mxu0 0.0
    %857 = vmatprep.subr.mxu0 0.0
    %858 = vmatpush2.msra.mxu0 0.0
    %859 = vmatprep.subr.mxu0 0.0
    %860 = vmatpush2.msra.mxu0 0.0
    %861 = vmatprep.subr.mxu0 0.0
    %862 = vmatpush2.msra.mxu0 0.0
    %863 = vmatprep.subr.mxu0 0.0
    %864 = vmatpush2.msra.mxu0 0.0
    %865 = vmatprep.subr.mxu0 0.0
    %866 = vmatpush2.msra.mxu0 0.0
    %867 = vmatprep.subr.mxu0 0.0
    %868 = vmatpush2.msra.mxu0 0.0
    %869 = vmatprep.mubr.f32.mxu0 0.0
    %870 = vmatmul.mubr.f32.gmra.mxu0 %v772
    %v871 = vpop.f32.mrf.mxu0
    %v872 = vadd.f32 0.0, %v871
    %v873 = vpop.f32.mrf.mxu0
    %v874 = vadd.f32 0.0, %v873
    %875 = vdwg.mxu0
    %s876 = scalar_lea.vmem [#allocation3], 24
    %v877 = vld [vmem:[%s876] sm:$0xff]
    %v878 = vadd.f32 %v877, %v872
    %v879 = vxor.u32 %v878, 2147483648
    %v880 = vmul.f32 %v879, 1.442695
    %v881 = vpow.pop %v880
    %v882 = vadd.f32 %v881, 1.0
    %v883 = vrcp.pop %v882
    %v884 = vmul.f32 1.0, %v883
    %s885 = scalar_lea.vmem [#allocation6], 24
    %v886 = vld [vmem:[%s885] sm:$0xff]
    %v887 = vadd.f32 %v886, %v874
    %v888 = vxor.u32 %v887, 2147483648
    %v889 = vmul.f32 %v888, 1.442695
    %v890 = vpow.pop %v889
    %v891 = vadd.f32 %v890, 1.0
    %v892 = vrcp.pop %v891
    %v893 = vmul.f32 1.0, %v892
    %s894 = scalar_lea.vmem [#allocation8], 24
    %v895 = vld [vmem:[%s894] sm:$0xff]
    %v896 = vmul.f32 %v893, %v772
    %v897 = vld [vmem:[#allocation12] sm:$0xff]
    %v898 = vld [vmem:[#allocation12 + $0x8] sm:$0xff]
    %v899 = vld [vmem:[#allocation12 + $0x10] sm:$0xff]
    %v900 = vld [vmem:[#allocation12 + $0x18] sm:$0xff]
    %v901 = vld [vmem:[#allocation12 + $0x20] sm:$0xff]
    %v902 = vld [vmem:[#allocation12 + $0x28] sm:$0xff]
    %v903 = vld [vmem:[#allocation12 + $0x30] sm:$0xff]
    %v904 = vld [vmem:[#allocation12 + $0x38] sm:$0xff]
    %v905 = vld [vmem:[#allocation12 + $0x40] sm:$0xff]
    %v906 = vld [vmem:[#allocation12 + $0x48] sm:$0xff]
    %v907 = vld [vmem:[#allocation12 + $0x50] sm:$0xff]
    %v908 = vld [vmem:[#allocation12 + $0x58] sm:$0xff]
    %v909 = vld [vmem:[#allocation12 + $0x60] sm:$0xff]
    %v910 = vld [vmem:[#allocation12 + $0x68] sm:$0xff]
    %v911 = vld [vmem:[#allocation12 + $0x70] sm:$0xff]
    %v912 = vld [vmem:[#allocation12 + $0x78] sm:$0xff]
    %913 = vmatprep.subr.mxu0 0.0
    %914 = vmatpush1.msra.mxu0 %v912
    %915 = vmatprep.subr.mxu0 0.0
    %916 = vmatpush1.msra.mxu0 %v911
    %917 = vmatprep.subr.mxu0 0.0
    %918 = vmatpush1.msra.mxu0 %v910
    %919 = vmatprep.subr.mxu0 0.0
    %920 = vmatpush1.msra.mxu0 %v909
    %921 = vmatprep.subr.mxu0 0.0
    %922 = vmatpush1.msra.mxu0 %v908
    %923 = vmatprep.subr.mxu0 0.0
    %924 = vmatpush1.msra.mxu0 %v907
    %925 = vmatprep.subr.mxu0 0.0
    %926 = vmatpush1.msra.mxu0 %v906
    %927 = vmatprep.subr.mxu0 0.0
    %928 = vmatpush1.msra.mxu0 %v905
    %929 = vmatprep.subr.mxu0 0.0
    %930 = vmatpush1.msra.mxu0 %v904
    %931 = vmatprep.subr.mxu0 0.0
    %932 = vmatpush1.msra.mxu0 %v903
    %933 = vmatprep.subr.mxu0 0.0
    %934 = vmatpush1.msra.mxu0 %v902
    %935 = vmatprep.subr.mxu0 0.0
    %936 = vmatpush1.msra.mxu0 %v901
    %937 = vmatprep.subr.mxu0 0.0
    %938 = vmatpush1.msra.mxu0 %v900
    %939 = vmatprep.subr.mxu0 0.0
    %940 = vmatpush1.msra.mxu0 %v899
    %941 = vmatprep.subr.mxu0 0.0
    %942 = vmatpush1.msra.mxu0 %v898
    %943 = vmatprep.subr.mxu0 0.0
    %944 = vmatpush1.msra.mxu0 %v897
    %945 = vmatprep.subr.mxu0 0.0
    %946 = vmatpush2.msra.mxu0 0.0
    %947 = vmatprep.subr.mxu0 0.0
    %948 = vmatpush2.msra.mxu0 0.0
    %949 = vmatprep.subr.mxu0 0.0
    %950 = vmatpush2.msra.mxu0 0.0
    %951 = vmatprep.subr.mxu0 0.0
    %952 = vmatpush2.msra.mxu0 0.0
    %953 = vmatprep.subr.mxu0 0.0
    %954 = vmatpush2.msra.mxu0 0.0
    %955 = vmatprep.subr.mxu0 0.0
    %956 = vmatpush2.msra.mxu0 0.0
    %957 = vmatprep.subr.mxu0 0.0
    %958 = vmatpush2.msra.mxu0 0.0
    %959 = vmatprep.subr.mxu0 0.0
    %960 = vmatpush2.msra.mxu0 0.0
    %961 = vmatprep.subr.mxu0 0.0
    %962 = vmatpush2.msra.mxu0 0.0
    %963 = vmatprep.subr.mxu0 0.0
    %964 = vmatpush2.msra.mxu0 0.0
    %965 = vmatprep.subr.mxu0 0.0
    %966 = vmatpush2.msra.mxu0 0.0
    %967 = vmatprep.subr.mxu0 0.0
    %968 = vmatpush2.msra.mxu0 0.0
    %969 = vmatprep.subr.mxu0 0.0
    %970 = vmatpush2.msra.mxu0 0.0
    %971 = vmatprep.subr.mxu0 0.0
    %972 = vmatpush2.msra.mxu0 0.0
    %973 = vmatprep.subr.mxu0 0.0
    %974 = vmatpush2.msra.mxu0 0.0
    %975 = vmatprep.subr.mxu0 0.0
    %976 = vmatpush2.msra.mxu0 0.0
    %977 = vmatprep.mubr.f32.mxu0 0.0
    %978 = vmatmul.mubr.f32.gmra.mxu0 %v896
    %v979 = vpop.f32.mrf.mxu0
    %v980 = vadd.f32 0.0, %v979
    %v981 = vpop.f32.mrf.mxu0
    %982 = vdwg.mxu0
    %v983 = vadd.f32 %v895, %v980
    %v984 = vtanh.pop %v983
    %v985 = vsub.f32 1.0, %v884
    %v986 = vmul.f32 %v985, %v772
    %v987 = vmul.f32 %v884, %v984
    %v988 = vadd.f32 %v986, %v987
    %s989 = scalar_lea.vmem [#allocation14], 24
    %990 = vst [vmem:[%s989] sm:$0xff] %v988
    %s991 = scalar_lea.vmem [#allocation9], 32
    %v992 = vld [vmem:[%s991] sm:$0xff]
    %v993 = vmul.f32 %v992, %v988
    %v994 = vld [vmem:[#allocation11] sm:$0xff]
    %v995 = vld [vmem:[#allocation11 + $0x8] sm:$0xff]
    %v996 = vld [vmem:[#allocation11 + $0x10] sm:$0xff]
    %v997 = vld [vmem:[#allocation11 + $0x18] sm:$0xff]
    %v998 = vld [vmem:[#allocation11 + $0x20] sm:$0xff]
    %v999 = vld [vmem:[#allocation11 + $0x28] sm:$0xff]
    %v1000 = vld [vmem:[#allocation11 + $0x30] sm:$0xff]
    %v1001 = vld [vmem:[#allocation11 + $0x38] sm:$0xff]
    %v1002 = vld [vmem:[#allocation11 + $0x40] sm:$0xff]
    %v1003 = vld [vmem:[#allocation11 + $0x48] sm:$0xff]
    %v1004 = vld [vmem:[#allocation11 + $0x50] sm:$0xff]
    %v1005 = vld [vmem:[#allocation11 + $0x58] sm:$0xff]
    %v1006 = vld [vmem:[#allocation11 + $0x60] sm:$0xff]
    %v1007 = vld [vmem:[#allocation11 + $0x68] sm:$0xff]
    %v1008 = vld [vmem:[#allocation11 + $0x70] sm:$0xff]
    %v1009 = vld [vmem:[#allocation11 + $0x78] sm:$0xff]
    %v1010 = vld [vmem:[#allocation11 + $0x80] sm:$0xff]
    %v1011 = vld [vmem:[#allocation11 + $0x88] sm:$0xff]
    %v1012 = vld [vmem:[#allocation11 + $0x90] sm:$0xff]
    %v1013 = vld [vmem:[#allocation11 + $0x98] sm:$0xff]
    %v1014 = vld [vmem:[#allocation11 + $0xa0] sm:$0xff]
    %v1015 = vld [vmem:[#allocation11 + $0xa8] sm:$0xff]
    %v1016 = vld [vmem:[#allocation11 + $0xb0] sm:$0xff]
    %v1017 = vld [vmem:[#allocation11 + $0xb8] sm:$0xff]
    %v1018 = vld [vmem:[#allocation11 + $0xc0] sm:$0xff]
    %v1019 = vld [vmem:[#allocation11 + $0xc8] sm:$0xff]
    %v1020 = vld [vmem:[#allocation11 + $0xd0] sm:$0xff]
    %v1021 = vld [vmem:[#allocation11 + $0xd8] sm:$0xff]
    %v1022 = vld [vmem:[#allocation11 + $0xe0] sm:$0xff]
    %v1023 = vld [vmem:[#allocation11 + $0xe8] sm:$0xff]
    %v1024 = vld [vmem:[#allocation11 + $0xf0] sm:$0xff]
    %v1025 = vld [vmem:[#allocation11 + $0xf8] sm:$0xff]
    %1026 = vmatprep.subr.mxu0 %v1025
    %1027 = vmatpush1.msra.mxu0 %v1024
    %1028 = vmatprep.subr.mxu0 %v1023
    %1029 = vmatpush1.msra.mxu0 %v1022
    %1030 = vmatprep.subr.mxu0 %v1021
    %1031 = vmatpush1.msra.mxu0 %v1020
    %1032 = vmatprep.subr.mxu0 %v1019
    %1033 = vmatpush1.msra.mxu0 %v1018
    %1034 = vmatprep.subr.mxu0 %v1017
    %1035 = vmatpush1.msra.mxu0 %v1016
    %1036 = vmatprep.subr.mxu0 %v1015
    %1037 = vmatpush1.msra.mxu0 %v1014
    %1038 = vmatprep.subr.mxu0 %v1013
    %1039 = vmatpush1.msra.mxu0 %v1012
    %1040 = vmatprep.subr.mxu0 %v1011
    %1041 = vmatpush1.msra.mxu0 %v1010
    %1042 = vmatprep.subr.mxu0 %v1009
    %1043 = vmatpush1.msra.mxu0 %v1008
    %1044 = vmatprep.subr.mxu0 %v1007
    %1045 = vmatpush1.msra.mxu0 %v1006
    %1046 = vmatprep.subr.mxu0 %v1005
    %1047 = vmatpush1.msra.mxu0 %v1004
    %1048 = vmatprep.subr.mxu0 %v1003
    %1049 = vmatpush1.msra.mxu0 %v1002
    %1050 = vmatprep.subr.mxu0 %v1001
    %1051 = vmatpush1.msra.mxu0 %v1000
    %1052 = vmatprep.subr.mxu0 %v999
    %1053 = vmatpush1.msra.mxu0 %v998
    %1054 = vmatprep.subr.mxu0 %v997
    %1055 = vmatpush1.msra.mxu0 %v996
    %1056 = vmatprep.subr.mxu0 %v995
    %1057 = vmatpush1.msra.mxu0 %v994
    %1058 = vmatprep.subr.mxu0 0.0
    %1059 = vmatpush2.msra.mxu0 0.0
    %1060 = vmatprep.subr.mxu0 0.0
    %1061 = vmatpush2.msra.mxu0 0.0
    %1062 = vmatprep.subr.mxu0 0.0
    %1063 = vmatpush2.msra.mxu0 0.0
    %1064 = vmatprep.subr.mxu0 0.0
    %1065 = vmatpush2.msra.mxu0 0.0
    %1066 = vmatprep.subr.mxu0 0.0
    %1067 = vmatpush2.msra.mxu0 0.0
    %1068 = vmatprep.subr.mxu0 0.0
    %1069 = vmatpush2.msra.mxu0 0.0
    %1070 = vmatprep.subr.mxu0 0.0
    %1071 = vmatpush2.msra.mxu0 0.0
    %1072 = vmatprep.subr.mxu0 0.0
    %1073 = vmatpush2.msra.mxu0 0.0
    %1074 = vmatprep.subr.mxu0 0.0
    %1075 = vmatpush2.msra.mxu0 0.0
    %1076 = vmatprep.subr.mxu0 0.0
    %1077 = vmatpush2.msra.mxu0 0.0
    %1078 = vmatprep.subr.mxu0 0.0
    %1079 = vmatpush2.msra.mxu0 0.0
    %1080 = vmatprep.subr.mxu0 0.0
    %1081 = vmatpush2.msra.mxu0 0.0
    %1082 = vmatprep.subr.mxu0 0.0
    %1083 = vmatpush2.msra.mxu0 0.0
    %1084 = vmatprep.subr.mxu0 0.0
    %1085 = vmatpush2.msra.mxu0 0.0
    %1086 = vmatprep.subr.mxu0 0.0
    %1087 = vmatpush2.msra.mxu0 0.0
    %1088 = vmatprep.subr.mxu0 0.0
    %1089 = vmatpush2.msra.mxu0 0.0
    %1090 = vmatprep.mubr.f32.mxu0 0.0
    %1091 = vmatmul.mubr.f32.gmra.mxu0 %v993
    %v1092 = vpop.f32.mrf.mxu0
    %v1093 = vadd.f32 0.0, %v1092
    %v1094 = vpop.f32.mrf.mxu0
    %v1095 = vadd.f32 0.0, %v1094
    %1096 = vdwg.mxu0
    %s1097 = scalar_lea.vmem [#allocation3], 32
    %v1098 = vld [vmem:[%s1097] sm:$0xff]
    %v1099 = vadd.f32 %v1098, %v1093
    %v1100 = vxor.u32 %v1099, 2147483648
    %v1101 = vmul.f32 %v1100, 1.442695
    %v1102 = vpow.pop %v1101
    %v1103 = vadd.f32 %v1102, 1.0
    %v1104 = vrcp.pop %v1103
    %v1105 = vmul.f32 1.0, %v1104
    %s1106 = scalar_lea.vmem [#allocation6], 32
    %v1107 = vld [vmem:[%s1106] sm:$0xff]
    %v1108 = vadd.f32 %v1107, %v1095
    %v1109 = vxor.u32 %v1108, 2147483648
    %v1110 = vmul.f32 %v1109, 1.442695
    %v1111 = vpow.pop %v1110
    %v1112 = vadd.f32 %v1111, 1.0
    %v1113 = vrcp.pop %v1112
    %v1114 = vmul.f32 1.0, %v1113
    %s1115 = scalar_lea.vmem [#allocation8], 32
    %v1116 = vld [vmem:[%s1115] sm:$0xff]
    %v1117 = vmul.f32 %v1114, %v993
    %v1118 = vld [vmem:[#allocation12] sm:$0xff]
    %v1119 = vld [vmem:[#allocation12 + $0x8] sm:$0xff]
    %v1120 = vld [vmem:[#allocation12 + $0x10] sm:$0xff]
    %v1121 = vld [vmem:[#allocation12 + $0x18] sm:$0xff]
    %v1122 = vld [vmem:[#allocation12 + $0x20] sm:$0xff]
    %v1123 = vld [vmem:[#allocation12 + $0x28] sm:$0xff]
    %v1124 = vld [vmem:[#allocation12 + $0x30] sm:$0xff]
    %v1125 = vld [vmem:[#allocation12 + $0x38] sm:$0xff]
    %v1126 = vld [vmem:[#allocation12 + $0x40] sm:$0xff]
    %v1127 = vld [vmem:[#allocation12 + $0x48] sm:$0xff]
    %v1128 = vld [vmem:[#allocation12 + $0x50] sm:$0xff]
    %v1129 = vld [vmem:[#allocation12 + $0x58] sm:$0xff]
    %v1130 = vld [vmem:[#allocation12 + $0x60] sm:$0xff]
    %v1131 = vld [vmem:[#allocation12 + $0x68] sm:$0xff]
    %v1132 = vld [vmem:[#allocation12 + $0x70] sm:$0xff]
    %v1133 = vld [vmem:[#allocation12 + $0x78] sm:$0xff]
    %1134 = vmatprep.subr.mxu0 0.0
    %1135 = vmatpush1.msra.mxu0 %v1133
    %1136 = vmatprep.subr.mxu0 0.0
    %1137 = vmatpush1.msra.mxu0 %v1132
    %1138 = vmatprep.subr.mxu0 0.0
    %1139 = vmatpush1.msra.mxu0 %v1131
    %1140 = vmatprep.subr.mxu0 0.0
    %1141 = vmatpush1.msra.mxu0 %v1130
    %1142 = vmatprep.subr.mxu0 0.0
    %1143 = vmatpush1.msra.mxu0 %v1129
    %1144 = vmatprep.subr.mxu0 0.0
    %1145 = vmatpush1.msra.mxu0 %v1128
    %1146 = vmatprep.subr.mxu0 0.0
    %1147 = vmatpush1.msra.mxu0 %v1127
    %1148 = vmatprep.subr.mxu0 0.0
    %1149 = vmatpush1.msra.mxu0 %v1126
    %1150 = vmatprep.subr.mxu0 0.0
    %1151 = vmatpush1.msra.mxu0 %v1125
    %1152 = vmatprep.subr.mxu0 0.0
    %1153 = vmatpush1.msra.mxu0 %v1124
    %1154 = vmatprep.subr.mxu0 0.0
    %1155 = vmatpush1.msra.mxu0 %v1123
    %1156 = vmatprep.subr.mxu0 0.0
    %1157 = vmatpush1.msra.mxu0 %v1122
    %1158 = vmatprep.subr.mxu0 0.0
    %1159 = vmatpush1.msra.mxu0 %v1121
    %1160 = vmatprep.subr.mxu0 0.0
    %1161 = vmatpush1.msra.mxu0 %v1120
    %1162 = vmatprep.subr.mxu0 0.0
    %1163 = vmatpush1.msra.mxu0 %v1119
    %1164 = vmatprep.subr.mxu0 0.0
    %1165 = vmatpush1.msra.mxu0 %v1118
    %1166 = vmatprep.subr.mxu0 0.0
    %1167 = vmatpush2.msra.mxu0 0.0
    %1168 = vmatprep.subr.mxu0 0.0
    %1169 = vmatpush2.msra.mxu0 0.0
    %1170 = vmatprep.subr.mxu0 0.0
    %1171 = vmatpush2.msra.mxu0 0.0
    %1172 = vmatprep.subr.mxu0 0.0
    %1173 = vmatpush2.msra.mxu0 0.0
    %1174 = vmatprep.subr.mxu0 0.0
    %1175 = vmatpush2.msra.mxu0 0.0
    %1176 = vmatprep.subr.mxu0 0.0
    %1177 = vmatpush2.msra.mxu0 0.0
    %1178 = vmatprep.subr.mxu0 0.0
    %1179 = vmatpush2.msra.mxu0 0.0
    %1180 = vmatprep.subr.mxu0 0.0
    %1181 = vmatpush2.msra.mxu0 0.0
    %1182 = vmatprep.subr.mxu0 0.0
    %1183 = vmatpush2.msra.mxu0 0.0
    %1184 = vmatprep.subr.mxu0 0.0
    %1185 = vmatpush2.msra.mxu0 0.0
    %1186 = vmatprep.subr.mxu0 0.0
    %1187 = vmatpush2.msra.mxu0 0.0
    %1188 = vmatprep.subr.mxu0 0.0
    %1189 = vmatpush2.msra.mxu0 0.0
    %1190 = vmatprep.subr.mxu0 0.0
    %1191 = vmatpush2.msra.mxu0 0.0
    %1192 = vmatprep.subr.mxu0 0.0
    %1193 = vmatpush2.msra.mxu0 0.0
    %1194 = vmatprep.subr.mxu0 0.0
    %1195 = vmatpush2.msra.mxu0 0.0
    %1196 = vmatprep.subr.mxu0 0.0
    %1197 = vmatpush2.msra.mxu0 0.0
    %1198 = vmatprep.mubr.f32.mxu0 0.0
    %1199 = vmatmul.mubr.f32.gmra.mxu0 %v1117
    %v1200 = vpop.f32.mrf.mxu0
    %v1201 = vadd.f32 0.0, %v1200
    %v1202 = vpop.f32.mrf.mxu0
    %1203 = vdwg.mxu0
    %v1204 = vadd.f32 %v1116, %v1201
    %v1205 = vtanh.pop %v1204
    %v1206 = vsub.f32 1.0, %v1105
    %v1207 = vmul.f32 %v1206, %v993
    %v1208 = vmul.f32 %v1105, %v1205
    %v1209 = vadd.f32 %v1207, %v1208
    %s1210 = scalar_lea.vmem [#allocation14], 32
    %1211 = vst [vmem:[%s1210] sm:$0xff] %v1209
    %s1212 = scalar_lea.vmem [#allocation9], 40
    %v1213 = vld [vmem:[%s1212] sm:$0xff]
    %v1214 = vmul.f32 %v1213, %v1209
    %v1215 = vld [vmem:[#allocation11] sm:$0xff]
    %v1216 = vld [vmem:[#allocation11 + $0x8] sm:$0xff]
    %v1217 = vld [vmem:[#allocation11 + $0x10] sm:$0xff]
    %v1218 = vld [vmem:[#allocation11 + $0x18] sm:$0xff]
    %v1219 = vld [vmem:[#allocation11 + $0x20] sm:$0xff]
    %v1220 = vld [vmem:[#allocation11 + $0x28] sm:$0xff]
    %v1221 = vld [vmem:[#allocation11 + $0x30] sm:$0xff]
    %v1222 = vld [vmem:[#allocation11 + $0x38] sm:$0xff]
    %v1223 = vld [vmem:[#allocation11 + $0x40] sm:$0xff]
    %v1224 = vld [vmem:[#allocation11 + $0x48] sm:$0xff]
    %v1225 = vld [vmem:[#allocation11 + $0x50] sm:$0xff]
    %v1226 = vld [vmem:[#allocation11 + $0x58] sm:$0xff]
    %v1227 = vld [vmem:[#allocation11 + $0x60] sm:$0xff]
    %v1228 = vld [vmem:[#allocation11 + $0x68] sm:$0xff]
    %v1229 = vld [vmem:[#allocation11 + $0x70] sm:$0xff]
    %v1230 = vld [vmem:[#allocation11 + $0x78] sm:$0xff]
    %v1231 = vld [vmem:[#allocation11 + $0x80] sm:$0xff]
    %v1232 = vld [vmem:[#allocation11 + $0x88] sm:$0xff]
    %v1233 = vld [vmem:[#allocation11 + $0x90] sm:$0xff]
    %v1234 = vld [vmem:[#allocation11 + $0x98] sm:$0xff]
    %v1235 = vld [vmem:[#allocation11 + $0xa0] sm:$0xff]
    %v1236 = vld [vmem:[#allocation11 + $0xa8] sm:$0xff]
    %v1237 = vld [vmem:[#allocation11 + $0xb0] sm:$0xff]
    %v1238 = vld [vmem:[#allocation11 + $0xb8] sm:$0xff]
    %v1239 = vld [vmem:[#allocation11 + $0xc0] sm:$0xff]
    %v1240 = vld [vmem:[#allocation11 + $0xc8] sm:$0xff]
    %v1241 = vld [vmem:[#allocation11 + $0xd0] sm:$0xff]
    %v1242 = vld [vmem:[#allocation11 + $0xd8] sm:$0xff]
    %v1243 = vld [vmem:[#allocation11 + $0xe0] sm:$0xff]
    %v1244 = vld [vmem:[#allocation11 + $0xe8] sm:$0xff]
    %v1245 = vld [vmem:[#allocation11 + $0xf0] sm:$0xff]
    %v1246 = vld [vmem:[#allocation11 + $0xf8] sm:$0xff]
    %1247 = vmatprep.subr.mxu0 %v1246
    %1248 = vmatpush1.msra.mxu0 %v1245
    %1249 = vmatprep.subr.mxu0 %v1244
    %1250 = vmatpush1.msra.mxu0 %v1243
    %1251 = vmatprep.subr.mxu0 %v1242
    %1252 = vmatpush1.msra.mxu0 %v1241
    %1253 = vmatprep.subr.mxu0 %v1240
    %1254 = vmatpush1.msra.mxu0 %v1239
    %1255 = vmatprep.subr.mxu0 %v1238
    %1256 = vmatpush1.msra.mxu0 %v1237
    %1257 = vmatprep.subr.mxu0 %v1236
    %1258 = vmatpush1.msra.mxu0 %v1235
    %1259 = vmatprep.subr.mxu0 %v1234
    %1260 = vmatpush1.msra.mxu0 %v1233
    %1261 = vmatprep.subr.mxu0 %v1232
    %1262 = vmatpush1.msra.mxu0 %v1231
    %1263 = vmatprep.subr.mxu0 %v1230
    %1264 = vmatpush1.msra.mxu0 %v1229
    %1265 = vmatprep.subr.mxu0 %v1228
    %1266 = vmatpush1.msra.mxu0 %v1227
    %1267 = vmatprep.subr.mxu0 %v1226
    %1268 = vmatpush1.msra.mxu0 %v1225
    %1269 = vmatprep.subr.mxu0 %v1224
    %1270 = vmatpush1.msra.mxu0 %v1223
    %1271 = vmatprep.subr.mxu0 %v1222
    %1272 = vmatpush1.msra.mxu0 %v1221
    %1273 = vmatprep.subr.mxu0 %v1220
    %1274 = vmatpush1.msra.mxu0 %v1219
    %1275 = vmatprep.subr.mxu0 %v1218
    %1276 = vmatpush1.msra.mxu0 %v1217
    %1277 = vmatprep.subr.mxu0 %v1216
    %1278 = vmatpush1.msra.mxu0 %v1215
    %1279 = vmatprep.subr.mxu0 0.0
    %1280 = vmatpush2.msra.mxu0 0.0
    %1281 = vmatprep.subr.mxu0 0.0
    %1282 = vmatpush2.msra.mxu0 0.0
    %1283 = vmatprep.subr.mxu0 0.0
    %1284 = vmatpush2.msra.mxu0 0.0
    %1285 = vmatprep.subr.mxu0 0.0
    %1286 = vmatpush2.msra.mxu0 0.0
    %1287 = vmatprep.subr.mxu0 0.0
    %1288 = vmatpush2.msra.mxu0 0.0
    %1289 = vmatprep.subr.mxu0 0.0
    %1290 = vmatpush2.msra.mxu0 0.0
    %1291 = vmatprep.subr.mxu0 0.0
    %1292 = vmatpush2.msra.mxu0 0.0
    %1293 = vmatprep.subr.mxu0 0.0
    %1294 = vmatpush2.msra.mxu0 0.0
    %1295 = vmatprep.subr.mxu0 0.0
    %1296 = vmatpush2.msra.mxu0 0.0
    %1297 = vmatprep.subr.mxu0 0.0
    %1298 = vmatpush2.msra.mxu0 0.0
    %1299 = vmatprep.subr.mxu0 0.0
    %1300 = vmatpush2.msra.mxu0 0.0
    %1301 = vmatprep.subr.mxu0 0.0
    %1302 = vmatpush2.msra.mxu0 0.0
    %1303 = vmatprep.subr.mxu0 0.0
    %1304 = vmatpush2.msra.mxu0 0.0
    %1305 = vmatprep.subr.mxu0 0.0
    %1306 = vmatpush2.msra.mxu0 0.0
    %1307 = vmatprep.subr.mxu0 0.0
    %1308 = vmatpush2.msra.mxu0 0.0
    %1309 = vmatprep.subr.mxu0 0.0
    %1310 = vmatpush2.msra.mxu0 0.0
    %1311 = vmatprep.mubr.f32.mxu0 0.0
    %1312 = vmatmul.mubr.f32.gmra.mxu0 %v1214
    %v1313 = vpop.f32.mrf.mxu0
    %v1314 = vadd.f32 0.0, %v1313
    %v1315 = vpop.f32.mrf.mxu0
    %v1316 = vadd.f32 0.0, %v1315
    %1317 = vdwg.mxu0
    %s1318 = scalar_lea.vmem [#allocation3], 40
    %v1319 = vld [vmem:[%s1318] sm:$0xff]
    %v1320 = vadd.f32 %v1319, %v1314
    %v1321 = vxor.u32 %v1320, 2147483648
    %v1322 = vmul.f32 %v1321, 1.442695
    %v1323 = vpow.pop %v1322
    %v1324 = vadd.f32 %v1323, 1.0
    %v1325 = vrcp.pop %v1324
    %v1326 = vmul.f32 1.0, %v1325
    %s1327 = scalar_lea.vmem [#allocation6], 40
    %v1328 = vld [vmem:[%s1327] sm:$0xff]
    %v1329 = vadd.f32 %v1328, %v1316
    %v1330 = vxor.u32 %v1329, 2147483648
    %v1331 = vmul.f32 %v1330, 1.442695
    %v1332 = vpow.pop %v1331
    %v1333 = vadd.f32 %v1332, 1.0
    %v1334 = vrcp.pop %v1333
    %v1335 = vmul.f32 1.0, %v1334
    %s1336 = scalar_lea.vmem [#allocation8], 40
    %v1337 = vld [vmem:[%s1336] sm:$0xff]
    %v1338 = vmul.f32 %v1335, %v1214
    %v1339 = vld [vmem:[#allocation12] sm:$0xff]
    %v1340 = vld [vmem:[#allocation12 + $0x8] sm:$0xff]
    %v1341 = vld [vmem:[#allocation12 + $0x10] sm:$0xff]
    %v1342 = vld [vmem:[#allocation12 + $0x18] sm:$0xff]
    %v1343 = vld [vmem:[#allocation12 + $0x20] sm:$0xff]
    %v1344 = vld [vmem:[#allocation12 + $0x28] sm:$0xff]
    %v1345 = vld [vmem:[#allocation12 + $0x30] sm:$0xff]
    %v1346 = vld [vmem:[#allocation12 + $0x38] sm:$0xff]
    %v1347 = vld [vmem:[#allocation12 + $0x40] sm:$0xff]
    %v1348 = vld [vmem:[#allocation12 + $0x48] sm:$0xff]
    %v1349 = vld [vmem:[#allocation12 + $0x50] sm:$0xff]
    %v1350 = vld [vmem:[#allocation12 + $0x58] sm:$0xff]
    %v1351 = vld [vmem:[#allocation12 + $0x60] sm:$0xff]
    %v1352 = vld [vmem:[#allocation12 + $0x68] sm:$0xff]
    %v1353 = vld [vmem:[#allocation12 + $0x70] sm:$0xff]
    %v1354 = vld [vmem:[#allocation12 + $0x78] sm:$0xff]
    %1355 = vmatprep.subr.mxu0 0.0
    %1356 = vmatpush1.msra.mxu0 %v1354
    %1357 = vmatprep.subr.mxu0 0.0
    %1358 = vmatpush1.msra.mxu0 %v1353
    %1359 = vmatprep.subr.mxu0 0.0
    %1360 = vmatpush1.msra.mxu0 %v1352
    %1361 = vmatprep.subr.mxu0 0.0
    %1362 = vmatpush1.msra.mxu0 %v1351
    %1363 = vmatprep.subr.mxu0 0.0
    %1364 = vmatpush1.msra.mxu0 %v1350
    %1365 = vmatprep.subr.mxu0 0.0
    %1366 = vmatpush1.msra.mxu0 %v1349
    %1367 = vmatprep.subr.mxu0 0.0
    %1368 = vmatpush1.msra.mxu0 %v1348
    %1369 = vmatprep.subr.mxu0 0.0
    %1370 = vmatpush1.msra.mxu0 %v1347
    %1371 = vmatprep.subr.mxu0 0.0
    %1372 = vmatpush1.msra.mxu0 %v1346
    %1373 = vmatprep.subr.mxu0 0.0
    %1374 = vmatpush1.msra.mxu0 %v1345
    %1375 = vmatprep.subr.mxu0 0.0
    %1376 = vmatpush1.msra.mxu0 %v1344
    %1377 = vmatprep.subr.mxu0 0.0
    %1378 = vmatpush1.msra.mxu0 %v1343
    %1379 = vmatprep.subr.mxu0 0.0
    %1380 = vmatpush1.msra.mxu0 %v1342
    %1381 = vmatprep.subr.mxu0 0.0
    %1382 = vmatpush1.msra.mxu0 %v1341
    %1383 = vmatprep.subr.mxu0 0.0
    %1384 = vmatpush1.msra.mxu0 %v1340
    %1385 = vmatprep.subr.mxu0 0.0
    %1386 = vmatpush1.msra.mxu0 %v1339
    %1387 = vmatprep.subr.mxu0 0.0
    %1388 = vmatpush2.msra.mxu0 0.0
    %1389 = vmatprep.subr.mxu0 0.0
    %1390 = vmatpush2.msra.mxu0 0.0
    %1391 = vmatprep.subr.mxu0 0.0
    %1392 = vmatpush2.msra.mxu0 0.0
    %1393 = vmatprep.subr.mxu0 0.0
    %1394 = vmatpush2.msra.mxu0 0.0
    %1395 = vmatprep.subr.mxu0 0.0
    %1396 = vmatpush2.msra.mxu0 0.0
    %1397 = vmatprep.subr.mxu0 0.0
    %1398 = vmatpush2.msra.mxu0 0.0
    %1399 = vmatprep.subr.mxu0 0.0
    %1400 = vmatpush2.msra.mxu0 0.0
    %1401 = vmatprep.subr.mxu0 0.0
    %1402 = vmatpush2.msra.mxu0 0.0
    %1403 = vmatprep.subr.mxu0 0.0
    %1404 = vmatpush2.msra.mxu0 0.0
    %1405 = vmatprep.subr.mxu0 0.0
    %1406 = vmatpush2.msra.mxu0 0.0
    %1407 = vmatprep.subr.mxu0 0.0
    %1408 = vmatpush2.msra.mxu0 0.0
    %1409 = vmatprep.subr.mxu0 0.0
    %1410 = vmatpush2.msra.mxu0 0.0
    %1411 = vmatprep.subr.mxu0 0.0
    %1412 = vmatpush2.msra.mxu0 0.0
    %1413 = vmatprep.subr.mxu0 0.0
    %1414 = vmatpush2.msra.mxu0 0.0
    %1415 = vmatprep.subr.mxu0 0.0
    %1416 = vmatpush2.msra.mxu0 0.0
    %1417 = vmatprep.subr.mxu0 0.0
    %1418 = vmatpush2.msra.mxu0 0.0
    %1419 = vmatprep.mubr.f32.mxu0 0.0
    %1420 = vmatmul.mubr.f32.gmra.mxu0 %v1338
    %v1421 = vpop.f32.mrf.mxu0
    %v1422 = vadd.f32 0.0, %v1421
    %v1423 = vpop.f32.mrf.mxu0
    %1424 = vdwg.mxu0
    %v1425 = vadd.f32 %v1337, %v1422
    %v1426 = vtanh.pop %v1425
    %v1427 = vsub.f32 1.0, %v1326
    %v1428 = vmul.f32 %v1427, %v1214
    %v1429 = vmul.f32 %v1326, %v1426
    %v1430 = vadd.f32 %v1428, %v1429
    %s1431 = scalar_lea.vmem [#allocation14], 40
    %1432 = vst [vmem:[%s1431] sm:$0xff] %v1430
    %s1433 = scalar_lea.vmem [#allocation9], 48
    %v1434 = vld [vmem:[%s1433] sm:$0xff]
    %v1435 = vmul.f32 %v1434, %v1430
    %v1436 = vld [vmem:[#allocation11] sm:$0xff]
    %v1437 = vld [vmem:[#allocation11 + $0x8] sm:$0xff]
    %v1438 = vld [vmem:[#allocation11 + $0x10] sm:$0xff]
    %v1439 = vld [vmem:[#allocation11 + $0x18] sm:$0xff]
    %v1440 = vld [vmem:[#allocation11 + $0x20] sm:$0xff]
    %v1441 = vld [vmem:[#allocation11 + $0x28] sm:$0xff]
    %v1442 = vld [vmem:[#allocation11 + $0x30] sm:$0xff]
    %v1443 = vld [vmem:[#allocation11 + $0x38] sm:$0xff]
    %v1444 = vld [vmem:[#allocation11 + $0x40] sm:$0xff]
    %v1445 = vld [vmem:[#allocation11 + $0x48] sm:$0xff]
    %v1446 = vld [vmem:[#allocation11 + $0x50] sm:$0xff]
    %v1447 = vld [vmem:[#allocation11 + $0x58] sm:$0xff]
    %v1448 = vld [vmem:[#allocation11 + $0x60] sm:$0xff]
    %v1449 = vld [vmem:[#allocation11 + $0x68] sm:$0xff]
    %v1450 = vld [vmem:[#allocation11 + $0x70] sm:$0xff]
    %v1451 = vld [vmem:[#allocation11 + $0x78] sm:$0xff]
    %v1452 = vld [vmem:[#allocation11 + $0x80] sm:$0xff]
    %v1453 = vld [vmem:[#allocation11 + $0x88] sm:$0xff]
    %v1454 = vld [vmem:[#allocation11 + $0x90] sm:$0xff]
    %v1455 = vld [vmem:[#allocation11 + $0x98] sm:$0xff]
    %v1456 = vld [vmem:[#allocation11 + $0xa0] sm:$0xff]
    %v1457 = vld [vmem:[#allocation11 + $0xa8] sm:$0xff]
    %v1458 = vld [vmem:[#allocation11 + $0xb0] sm:$0xff]
    %v1459 = vld [vmem:[#allocation11 + $0xb8] sm:$0xff]
    %v1460 = vld [vmem:[#allocation11 + $0xc0] sm:$0xff]
    %v1461 = vld [vmem:[#allocation11 + $0xc8] sm:$0xff]
    %v1462 = vld [vmem:[#allocation11 + $0xd0] sm:$0xff]
    %v1463 = vld [vmem:[#allocation11 + $0xd8] sm:$0xff]
    %v1464 = vld [vmem:[#allocation11 + $0xe0] sm:$0xff]
    %v1465 = vld [vmem:[#allocation11 + $0xe8] sm:$0xff]
    %v1466 = vld [vmem:[#allocation11 + $0xf0] sm:$0xff]
    %v1467 = vld [vmem:[#allocation11 + $0xf8] sm:$0xff]
    %1468 = vmatprep.subr.mxu0 %v1467
    %1469 = vmatpush1.msra.mxu0 %v1466
    %1470 = vmatprep.subr.mxu0 %v1465
    %1471 = vmatpush1.msra.mxu0 %v1464
    %1472 = vmatprep.subr.mxu0 %v1463
    %1473 = vmatpush1.msra.mxu0 %v1462
    %1474 = vmatprep.subr.mxu0 %v1461
    %1475 = vmatpush1.msra.mxu0 %v1460
    %1476 = vmatprep.subr.mxu0 %v1459
    %1477 = vmatpush1.msra.mxu0 %v1458
    %1478 = vmatprep.subr.mxu0 %v1457
    %1479 = vmatpush1.msra.mxu0 %v1456
    %1480 = vmatprep.subr.mxu0 %v1455
    %1481 = vmatpush1.msra.mxu0 %v1454
    %1482 = vmatprep.subr.mxu0 %v1453
    %1483 = vmatpush1.msra.mxu0 %v1452
    %1484 = vmatprep.subr.mxu0 %v1451
    %1485 = vmatpush1.msra.mxu0 %v1450
    %1486 = vmatprep.subr.mxu0 %v1449
    %1487 = vmatpush1.msra.mxu0 %v1448
    %1488 = vmatprep.subr.mxu0 %v1447
    %1489 = vmatpush1.msra.mxu0 %v1446
    %1490 = vmatprep.subr.mxu0 %v1445
    %1491 = vmatpush1.msra.mxu0 %v1444
    %1492 = vmatprep.subr.mxu0 %v1443
    %1493 = vmatpush1.msra.mxu0 %v1442
    %1494 = vmatprep.subr.mxu0 %v1441
    %1495 = vmatpush1.msra.mxu0 %v1440
    %1496 = vmatprep.subr.mxu0 %v1439
    %1497 = vmatpush1.msra.mxu0 %v1438
    %1498 = vmatprep.subr.mxu0 %v1437
    %1499 = vmatpush1.msra.mxu0 %v1436
    %1500 = vmatprep.subr.mxu0 0.0
    %1501 = vmatpush2.msra.mxu0 0.0
    %1502 = vmatprep.subr.mxu0 0.0
    %1503 = vmatpush2.msra.mxu0 0.0
    %1504 = vmatprep.subr.mxu0 0.0
    %1505 = vmatpush2.msra.mxu0 0.0
    %1506 = vmatprep.subr.mxu0 0.0
    %1507 = vmatpush2.msra.mxu0 0.0
    %1508 = vmatprep.subr.mxu0 0.0
    %1509 = vmatpush2.msra.mxu0 0.0
    %1510 = vmatprep.subr.mxu0 0.0
    %1511 = vmatpush2.msra.mxu0 0.0
    %1512 = vmatprep.subr.mxu0 0.0
    %1513 = vmatpush2.msra.mxu0 0.0
    %1514 = vmatprep.subr.mxu0 0.0
    %1515 = vmatpush2.msra.mxu0 0.0
    %1516 = vmatprep.subr.mxu0 0.0
    %1517 = vmatpush2.msra.mxu0 0.0
    %1518 = vmatprep.subr.mxu0 0.0
    %1519 = vmatpush2.msra.mxu0 0.0
    %1520 = vmatprep.subr.mxu0 0.0
    %1521 = vmatpush2.msra.mxu0 0.0
    %1522 = vmatprep.subr.mxu0 0.0
    %1523 = vmatpush2.msra.mxu0 0.0
    %1524 = vmatprep.subr.mxu0 0.0
    %1525 = vmatpush2.msra.mxu0 0.0
    %1526 = vmatprep.subr.mxu0 0.0
    %1527 = vmatpush2.msra.mxu0 0.0
    %1528 = vmatprep.subr.mxu0 0.0
    %1529 = vmatpush2.msra.mxu0 0.0
    %1530 = vmatprep.subr.mxu0 0.0
    %1531 = vmatpush2.msra.mxu0 0.0
    %1532 = vmatprep.mubr.f32.mxu0 0.0
    %1533 = vmatmul.mubr.f32.gmra.mxu0 %v1435
    %v1534 = vpop.f32.mrf.mxu0
    %v1535 = vadd.f32 0.0, %v1534
    %v1536 = vpop.f32.mrf.mxu0
    %v1537 = vadd.f32 0.0, %v1536
    %1538 = vdwg.mxu0
    %s1539 = scalar_lea.vmem [#allocation3], 48
    %v1540 = vld [vmem:[%s1539] sm:$0xff]
    %v1541 = vadd.f32 %v1540, %v1535
    %v1542 = vxor.u32 %v1541, 2147483648
    %v1543 = vmul.f32 %v1542, 1.442695
    %v1544 = vpow.pop %v1543
    %v1545 = vadd.f32 %v1544, 1.0
    %v1546 = vrcp.pop %v1545
    %v1547 = vmul.f32 1.0, %v1546
    %s1548 = scalar_lea.vmem [#allocation6], 48
    %v1549 = vld [vmem:[%s1548] sm:$0xff]
    %v1550 = vadd.f32 %v1549, %v1537
    %v1551 = vxor.u32 %v1550, 2147483648
    %v1552 = vmul.f32 %v1551, 1.442695
    %v1553 = vpow.pop %v1552
    %v1554 = vadd.f32 %v1553, 1.0
    %v1555 = vrcp.pop %v1554
    %v1556 = vmul.f32 1.0, %v1555
    %s1557 = scalar_lea.vmem [#allocation8], 48
    %v1558 = vld [vmem:[%s1557] sm:$0xff]
    %v1559 = vmul.f32 %v1556, %v1435
    %v1560 = vld [vmem:[#allocation12] sm:$0xff]
    %v1561 = vld [vmem:[#allocation12 + $0x8] sm:$0xff]
    %v1562 = vld [vmem:[#allocation12 + $0x10] sm:$0xff]
    %v1563 = vld [vmem:[#allocation12 + $0x18] sm:$0xff]
    %v1564 = vld [vmem:[#allocation12 + $0x20] sm:$0xff]
    %v1565 = vld [vmem:[#allocation12 + $0x28] sm:$0xff]
    %v1566 = vld [vmem:[#allocation12 + $0x30] sm:$0xff]
    %v1567 = vld [vmem:[#allocation12 + $0x38] sm:$0xff]
    %v1568 = vld [vmem:[#allocation12 + $0x40] sm:$0xff]
    %v1569 = vld [vmem:[#allocation12 + $0x48] sm:$0xff]
    %v1570 = vld [vmem:[#allocation12 + $0x50] sm:$0xff]
    %v1571 = vld [vmem:[#allocation12 + $0x58] sm:$0xff]
    %v1572 = vld [vmem:[#allocation12 + $0x60] sm:$0xff]
    %v1573 = vld [vmem:[#allocation12 + $0x68] sm:$0xff]
    %v1574 = vld [vmem:[#allocation12 + $0x70] sm:$0xff]
    %v1575 = vld [vmem:[#allocation12 + $0x78] sm:$0xff]
    %1576 = vmatprep.subr.mxu0 0.0
    %1577 = vmatpush1.msra.mxu0 %v1575
    %1578 = vmatprep.subr.mxu0 0.0
    %1579 = vmatpush1.msra.mxu0 %v1574
    %1580 = vmatprep.subr.mxu0 0.0
    %1581 = vmatpush1.msra.mxu0 %v1573
    %1582 = vmatprep.subr.mxu0 0.0
    %1583 = vmatpush1.msra.mxu0 %v1572
    %1584 = vmatprep.subr.mxu0 0.0
    %1585 = vmatpush1.msra.mxu0 %v1571
    %1586 = vmatprep.subr.mxu0 0.0
    %1587 = vmatpush1.msra.mxu0 %v1570
    %1588 = vmatprep.subr.mxu0 0.0
    %1589 = vmatpush1.msra.mxu0 %v1569
    %1590 = vmatprep.subr.mxu0 0.0
    %1591 = vmatpush1.msra.mxu0 %v1568
    %1592 = vmatprep.subr.mxu0 0.0
    %1593 = vmatpush1.msra.mxu0 %v1567
    %1594 = vmatprep.subr.mxu0 0.0
    %1595 = vmatpush1.msra.mxu0 %v1566
    %1596 = vmatprep.subr.mxu0 0.0
    %1597 = vmatpush1.msra.mxu0 %v1565
    %1598 = vmatprep.subr.mxu0 0.0
    %1599 = vmatpush1.msra.mxu0 %v1564
    %1600 = vmatprep.subr.mxu0 0.0
    %1601 = vmatpush1.msra.mxu0 %v1563
    %1602 = vmatprep.subr.mxu0 0.0
    %1603 = vmatpush1.msra.mxu0 %v1562
    %1604 = vmatprep.subr.mxu0 0.0
    %1605 = vmatpush1.msra.mxu0 %v1561
    %1606 = vmatprep.subr.mxu0 0.0
    %1607 = vmatpush1.msra.mxu0 %v1560
    %1608 = vmatprep.subr.mxu0 0.0
    %1609 = vmatpush2.msra.mxu0 0.0
    %1610 = vmatprep.subr.mxu0 0.0
    %1611 = vmatpush2.msra.mxu0 0.0
    %1612 = vmatprep.subr.mxu0 0.0
    %1613 = vmatpush2.msra.mxu0 0.0
    %1614 = vmatprep.subr.mxu0 0.0
    %1615 = vmatpush2.msra.mxu0 0.0
    %1616 = vmatprep.subr.mxu0 0.0
    %1617 = vmatpush2.msra.mxu0 0.0
    %1618 = vmatprep.subr.mxu0 0.0
    %1619 = vmatpush2.msra.mxu0 0.0
    %1620 = vmatprep.subr.mxu0 0.0
    %1621 = vmatpush2.msra.mxu0 0.0
    %1622 = vmatprep.subr.mxu0 0.0
    %1623 = vmatpush2.msra.mxu0 0.0
    %1624 = vmatprep.subr.mxu0 0.0
    %1625 = vmatpush2.msra.mxu0 0.0
    %1626 = vmatprep.subr.mxu0 0.0
    %1627 = vmatpush2.msra.mxu0 0.0
    %1628 = vmatprep.subr.mxu0 0.0
    %1629 = vmatpush2.msra.mxu0 0.0
    %1630 = vmatprep.subr.mxu0 0.0
    %1631 = vmatpush2.msra.mxu0 0.0
    %1632 = vmatprep.subr.mxu0 0.0
    %1633 = vmatpush2.msra.mxu0 0.0
    %1634 = vmatprep.subr.mxu0 0.0
    %1635 = vmatpush2.msra.mxu0 0.0
    %1636 = vmatprep.subr.mxu0 0.0
    %1637 = vmatpush2.msra.mxu0 0.0
    %1638 = vmatprep.subr.mxu0 0.0
    %1639 = vmatpush2.msra.mxu0 0.0
    %1640 = vmatprep.mubr.f32.mxu0 0.0
    %1641 = vmatmul.mubr.f32.gmra.mxu0 %v1559
    %v1642 = vpop.f32.mrf.mxu0
    %v1643 = vadd.f32 0.0, %v1642
    %v1644 = vpop.f32.mrf.mxu0
    %1645 = vdwg.mxu0
    %v1646 = vadd.f32 %v1558, %v1643
    %v1647 = vtanh.pop %v1646
    %v1648 = vsub.f32 1.0, %v1547
    %v1649 = vmul.f32 %v1648, %v1435
    %v1650 = vmul.f32 %v1547, %v1647
    %v1651 = vadd.f32 %v1649, %v1650
    %s1652 = scalar_lea.vmem [#allocation14], 48
    %1653 = vst [vmem:[%s1652] sm:$0xff] %v1651
    %s1654 = scalar_lea.vmem [#allocation9], 56
    %v1655 = vld [vmem:[%s1654] sm:$0xff]
    %v1656 = vmul.f32 %v1655, %v1651
    %v1657 = vld [vmem:[#allocation11] sm:$0xff]
    %v1658 = vld [vmem:[#allocation11 + $0x8] sm:$0xff]
    %v1659 = vld [vmem:[#allocation11 + $0x10] sm:$0xff]
    %v1660 = vld [vmem:[#allocation11 + $0x18] sm:$0xff]
    %v1661 = vld [vmem:[#allocation11 + $0x20] sm:$0xff]
    %v1662 = vld [vmem:[#allocation11 + $0x28] sm:$0xff]
    %v1663 = vld [vmem:[#allocation11 + $0x30] sm:$0xff]
    %v1664 = vld [vmem:[#allocation11 + $0x38] sm:$0xff]
    %v1665 = vld [vmem:[#allocation11 + $0x40] sm:$0xff]
    %v1666 = vld [vmem:[#allocation11 + $0x48] sm:$0xff]
    %v1667 = vld [vmem:[#allocation11 + $0x50] sm:$0xff]
    %v1668 = vld [vmem:[#allocation11 + $0x58] sm:$0xff]
    %v1669 = vld [vmem:[#allocation11 + $0x60] sm:$0xff]
    %v1670 = vld [vmem:[#allocation11 + $0x68] sm:$0xff]
    %v1671 = vld [vmem:[#allocation11 + $0x70] sm:$0xff]
    %v1672 = vld [vmem:[#allocation11 + $0x78] sm:$0xff]
    %v1673 = vld [vmem:[#allocation11 + $0x80] sm:$0xff]
    %v1674 = vld [vmem:[#allocation11 + $0x88] sm:$0xff]
    %v1675 = vld [vmem:[#allocation11 + $0x90] sm:$0xff]
    %v1676 = vld [vmem:[#allocation11 + $0x98] sm:$0xff]
    %v1677 = vld [vmem:[#allocation11 + $0xa0] sm:$0xff]
    %v1678 = vld [vmem:[#allocation11 + $0xa8] sm:$0xff]
    %v1679 = vld [vmem:[#allocation11 + $0xb0] sm:$0xff]
    %v1680 = vld [vmem:[#allocation11 + $0xb8] sm:$0xff]
    %v1681 = vld [vmem:[#allocation11 + $0xc0] sm:$0xff]
    %v1682 = vld [vmem:[#allocation11 + $0xc8] sm:$0xff]
    %v1683 = vld [vmem:[#allocation11 + $0xd0] sm:$0xff]
    %v1684 = vld [vmem:[#allocation11 + $0xd8] sm:$0xff]
    %v1685 = vld [vmem:[#allocation11 + $0xe0] sm:$0xff]
    %v1686 = vld [vmem:[#allocation11 + $0xe8] sm:$0xff]
    %v1687 = vld [vmem:[#allocation11 + $0xf0] sm:$0xff]
    %v1688 = vld [vmem:[#allocation11 + $0xf8] sm:$0xff]
    %1689 = vmatprep.subr.mxu0 %v1688
    %1690 = vmatpush1.msra.mxu0 %v1687
    %1691 = vmatprep.subr.mxu0 %v1686
    %1692 = vmatpush1.msra.mxu0 %v1685
    %1693 = vmatprep.subr.mxu0 %v1684
    %1694 = vmatpush1.msra.mxu0 %v1683
    %1695 = vmatprep.subr.mxu0 %v1682
    %1696 = vmatpush1.msra.mxu0 %v1681
    %1697 = vmatprep.subr.mxu0 %v1680
    %1698 = vmatpush1.msra.mxu0 %v1679
    %1699 = vmatprep.subr.mxu0 %v1678
    %1700 = vmatpush1.msra.mxu0 %v1677
    %1701 = vmatprep.subr.mxu0 %v1676
    %1702 = vmatpush1.msra.mxu0 %v1675
    %1703 = vmatprep.subr.mxu0 %v1674
    %1704 = vmatpush1.msra.mxu0 %v1673
    %1705 = vmatprep.subr.mxu0 %v1672
    %1706 = vmatpush1.msra.mxu0 %v1671
    %1707 = vmatprep.subr.mxu0 %v1670
    %1708 = vmatpush1.msra.mxu0 %v1669
    %1709 = vmatprep.subr.mxu0 %v1668
    %1710 = vmatpush1.msra.mxu0 %v1667
    %1711 = vmatprep.subr.mxu0 %v1666
    %1712 = vmatpush1.msra.mxu0 %v1665
    %1713 = vmatprep.subr.mxu0 %v1664
    %1714 = vmatpush1.msra.mxu0 %v1663
    %1715 = vmatprep.subr.mxu0 %v1662
    %1716 = vmatpush1.msra.mxu0 %v1661
    %1717 = vmatprep.subr.mxu0 %v1660
    %1718 = vmatpush1.msra.mxu0 %v1659
    %1719 = vmatprep.subr.mxu0 %v1658
    %1720 = vmatpush1.msra.mxu0 %v1657
    %1721 = vmatprep.subr.mxu0 0.0
    %1722 = vmatpush2.msra.mxu0 0.0
    %1723 = vmatprep.subr.mxu0 0.0
    %1724 = vmatpush2.msra.mxu0 0.0
    %1725 = vmatprep.subr.mxu0 0.0
    %1726 = vmatpush2.msra.mxu0 0.0
    %1727 = vmatprep.subr.mxu0 0.0
    %1728 = vmatpush2.msra.mxu0 0.0
    %1729 = vmatprep.subr.mxu0 0.0
    %1730 = vmatpush2.msra.mxu0 0.0
    %1731 = vmatprep.subr.mxu0 0.0
    %1732 = vmatpush2.msra.mxu0 0.0
    %1733 = vmatprep.subr.mxu0 0.0
    %1734 = vmatpush2.msra.mxu0 0.0
    %1735 = vmatprep.subr.mxu0 0.0
    %1736 = vmatpush2.msra.mxu0 0.0
    %1737 = vmatprep.subr.mxu0 0.0
    %1738 = vmatpush2.msra.mxu0 0.0
    %1739 = vmatprep.subr.mxu0 0.0
    %1740 = vmatpush2.msra.mxu0 0.0
    %1741 = vmatprep.subr.mxu0 0.0
    %1742 = vmatpush2.msra.mxu0 0.0
    %1743 = vmatprep.subr.mxu0 0.0
    %1744 = vmatpush2.msra.mxu0 0.0
    %1745 = vmatprep.subr.mxu0 0.0
    %1746 = vmatpush2.msra.mxu0 0.0
    %1747 = vmatprep.subr.mxu0 0.0
    %1748 = vmatpush2.msra.mxu0 0.0
    %1749 = vmatprep.subr.mxu0 0.0
    %1750 = vmatpush2.msra.mxu0 0.0
    %1751 = vmatprep.subr.mxu0 0.0
    %1752 = vmatpush2.msra.mxu0 0.0
    %1753 = vmatprep.mubr.f32.mxu0 0.0
    %1754 = vmatmul.mubr.f32.gmra.mxu0 %v1656
    %v1755 = vpop.f32.mrf.mxu0
    %v1756 = vadd.f32 0.0, %v1755
    %v1757 = vpop.f32.mrf.mxu0
    %v1758 = vadd.f32 0.0, %v1757
    %1759 = vdwg.mxu0
    %s1760 = scalar_lea.vmem [#allocation3], 56
    %v1761 = vld [vmem:[%s1760] sm:$0xff]
    %v1762 = vadd.f32 %v1761, %v1756
    %v1763 = vxor.u32 %v1762, 2147483648
    %v1764 = vmul.f32 %v1763, 1.442695
    %v1765 = vpow.pop %v1764
    %v1766 = vadd.f32 %v1765, 1.0
    %v1767 = vrcp.pop %v1766
    %v1768 = vmul.f32 1.0, %v1767
    %s1769 = scalar_lea.vmem [#allocation6], 56
    %v1770 = vld [vmem:[%s1769] sm:$0xff]
    %v1771 = vadd.f32 %v1770, %v1758
    %v1772 = vxor.u32 %v1771, 2147483648
    %v1773 = vmul.f32 %v1772, 1.442695
    %v1774 = vpow.pop %v1773
    %v1775 = vadd.f32 %v1774, 1.0
    %v1776 = vrcp.pop %v1775
    %v1777 = vmul.f32 1.0, %v1776
    %s1778 = scalar_lea.vmem [#allocation8], 56
    %v1779 = vld [vmem:[%s1778] sm:$0xff]
    %v1780 = vmul.f32 %v1777, %v1656
    %v1781 = vld [vmem:[#allocation12] sm:$0xff]
    %v1782 = vld [vmem:[#allocation12 + $0x8] sm:$0xff]
    %v1783 = vld [vmem:[#allocation12 + $0x10] sm:$0xff]
    %v1784 = vld [vmem:[#allocation12 + $0x18] sm:$0xff]
    %v1785 = vld [vmem:[#allocation12 + $0x20] sm:$0xff]
    %v1786 = vld [vmem:[#allocation12 + $0x28] sm:$0xff]
    %v1787 = vld [vmem:[#allocation12 + $0x30] sm:$0xff]
    %v1788 = vld [vmem:[#allocation12 + $0x38] sm:$0xff]
    %v1789 = vld [vmem:[#allocation12 + $0x40] sm:$0xff]
    %v1790 = vld [vmem:[#allocation12 + $0x48] sm:$0xff]
    %v1791 = vld [vmem:[#allocation12 + $0x50] sm:$0xff]
    %v1792 = vld [vmem:[#allocation12 + $0x58] sm:$0xff]
    %v1793 = vld [vmem:[#allocation12 + $0x60] sm:$0xff]
    %v1794 = vld [vmem:[#allocation12 + $0x68] sm:$0xff]
    %v1795 = vld [vmem:[#allocation12 + $0x70] sm:$0xff]
    %v1796 = vld [vmem:[#allocation12 + $0x78] sm:$0xff]
    %1797 = vmatprep.subr.mxu0 0.0
    %1798 = vmatpush1.msra.mxu0 %v1796
    %1799 = vmatprep.subr.mxu0 0.0
    %1800 = vmatpush1.msra.mxu0 %v1795
    %1801 = vmatprep.subr.mxu0 0.0
    %1802 = vmatpush1.msra.mxu0 %v1794
    %1803 = vmatprep.subr.mxu0 0.0
    %1804 = vmatpush1.msra.mxu0 %v1793
    %1805 = vmatprep.subr.mxu0 0.0
    %1806 = vmatpush1.msra.mxu0 %v1792
    %1807 = vmatprep.subr.mxu0 0.0
    %1808 = vmatpush1.msra.mxu0 %v1791
    %1809 = vmatprep.subr.mxu0 0.0
    %1810 = vmatpush1.msra.mxu0 %v1790
    %1811 = vmatprep.subr.mxu0 0.0
    %1812 = vmatpush1.msra.mxu0 %v1789
    %1813 = vmatprep.subr.mxu0 0.0
    %1814 = vmatpush1.msra.mxu0 %v1788
    %1815 = vmatprep.subr.mxu0 0.0
    %1816 = vmatpush1.msra.mxu0 %v1787
    %1817 = vmatprep.subr.mxu0 0.0
    %1818 = vmatpush1.msra.mxu0 %v1786
    %1819 = vmatprep.subr.mxu0 0.0
    %1820 = vmatpush1.msra.mxu0 %v1785
    %1821 = vmatprep.subr.mxu0 0.0
    %1822 = vmatpush1.msra.mxu0 %v1784
    %1823 = vmatprep.subr.mxu0 0.0
    %1824 = vmatpush1.msra.mxu0 %v1783
    %1825 = vmatprep.subr.mxu0 0.0
    %1826 = vmatpush1.msra.mxu0 %v1782
    %1827 = vmatprep.subr.mxu0 0.0
    %1828 = vmatpush1.msra.mxu0 %v1781
    %1829 = vmatprep.subr.mxu0 0.0
    %1830 = vmatpush2.msra.mxu0 0.0
    %1831 = vmatprep.subr.mxu0 0.0
    %1832 = vmatpush2.msra.mxu0 0.0
    %1833 = vmatprep.subr.mxu0 0.0
    %1834 = vmatpush2.msra.mxu0 0.0
    %1835 = vmatprep.subr.mxu0 0.0
    %1836 = vmatpush2.msra.mxu0 0.0
    %1837 = vmatprep.subr.mxu0 0.0
    %1838 = vmatpush2.msra.mxu0 0.0
    %1839 = vmatprep.subr.mxu0 0.0
    %1840 = vmatpush2.msra.mxu0 0.0
    %1841 = vmatprep.subr.mxu0 0.0
    %1842 = vmatpush2.msra.mxu0 0.0
    %1843 = vmatprep.subr.mxu0 0.0
    %1844 = vmatpush2.msra.mxu0 0.0
    %1845 = vmatprep.subr.mxu0 0.0
    %1846 = vmatpush2.msra.mxu0 0.0
    %1847 = vmatprep.subr.mxu0 0.0
    %1848 = vmatpush2.msra.mxu0 0.0
    %1849 = vmatprep.subr.mxu0 0.0
    %1850 = vmatpush2.msra.mxu0 0.0
    %1851 = vmatprep.subr.mxu0 0.0
    %1852 = vmatpush2.msra.mxu0 0.0
    %1853 = vmatprep.subr.mxu0 0.0
    %1854 = vmatpush2.msra.mxu0 0.0
    %1855 = vmatprep.subr.mxu0 0.0
    %1856 = vmatpush2.msra.mxu0 0.0
    %1857 = vmatprep.subr.mxu0 0.0
    %1858 = vmatpush2.msra.mxu0 0.0
    %1859 = vmatprep.subr.mxu0 0.0
    %1860 = vmatpush2.msra.mxu0 0.0
    %1861 = vmatprep.mubr.f32.mxu0 0.0
    %1862 = vmatmul.mubr.f32.gmra.mxu0 %v1780
    %v1863 = vpop.f32.mrf.mxu0
    %v1864 = vadd.f32 0.0, %v1863
    %v1865 = vpop.f32.mrf.mxu0
    %1866 = vdwg.mxu0
    %v1867 = vadd.f32 %v1779, %v1864
    %v1868 = vtanh.pop %v1867
    %v1869 = vsub.f32 1.0, %v1768
    %v1870 = vmul.f32 %v1869, %v1656
    %v1871 = vmul.f32 %v1768, %v1868
    %v1872 = vadd.f32 %v1870, %v1871
    %s1873 = scalar_lea.vmem [#allocation14], 56
    %1874 = vst [vmem:[%s1873] sm:$0xff] %v1872
    %1875 = vst [vmem:[#allocation2] sm:$0xff] %v1872
    // Predicated region
    $region54: #{tpu_custom_call.1} parent=1 // pred_check
      _
    $region55: #{tpu_custom_call.1} parent=1 // pred_check_branch
      %1877 = sbr.rel (0) target = $region57
    $region56: #{tpu_custom_call.1} parent=1 // pred_region
      %s1879 = ssub.s32 1024, 1024
      %1880 = vsyncadd [#allocation5], %s1879
      %s1881 = sshll.u32 [#allocation14], 4
      %s1882 = int_to_ptr.vmem [resolvable:$true] %s1881
      %1887 = dma.vmem_to_hbm [thread:$0]  %s1882, 1024, %s6, [#allocation5], 128, 128, 8
    $region57: #{tpu_custom_call.1} parent=1 // pred_fallthru
      _
    // Predicated region
    $region58: #{tpu_custom_call.1} parent=1 // pred_check
      _
    $region59: #{tpu_custom_call.1} parent=1 // pred_check_branch
      %1889 = sbr.rel (0) target = $region61
    $region60: #{tpu_custom_call.1} parent=1 // pred_region
      %1890 = dma.done [#allocation5], 1024
    $region61: #{tpu_custom_call.1} parent=1 // pred_fallthru
      _
    %1891 = vsyncpa [#allocation4], 1
    %1892 = vsyncpa [#allocation7], 1
    %1893 = vsyncpa [#allocation10], 1
    %1894 = vsyncpa [#allocation13], 1
    %1895 = vsyncpa [#allocation5], 1

</llo_original>
